<compile_context>
chip_gen: v7x
topology: tpu7x:2x2x1
jax: 0.10.0
libtpu: 0.0.40
codegen_flags: <defaults>
</compile_context>

<pallas_src>
import functools

import jax
import jax.numpy as jnp
from jax.experimental import pallas as pl
from jax.experimental.pallas import tpu as pltpu


def _round_up(v, m):
    return (v + m - 1) // m * m


def _combined_readout_kernel(
    batch_row_ref,   # [1, tile_N]  int32 graph ids (lane layout, for one-hot)
    batch_col_ref,   # [tile_N, 1]  int32 graph ids (sublane layout, for max mask)
    x_ref,           # [tile_N, C_pad] f32 node features
    w1_ref,          # [C_pad, C_pad] f32 (W1^T, y = x @ w1)
    b1_ref,          # [1, C_pad]     f32
    w2_ref,          # [C_pad, C_pad] f32 (W2^T)
    b2_ref,          # [1, C_pad]     f32
    sum_ref,         # [G_pad, C_pad] out: sum pool        (accumulator)
    mean_ref,        # [G_pad, C_pad] out: mean pool       (written at last step)
    max_ref,         # [G_pad, C_pad] out: max pool        (accumulator)
    mlp_ref,         # [G_pad, C_pad] out: mlp_sum pool    (written at last step)
    acc_relu_ref,    # [G_pad, C_pad] f32 scratch: segment_sum(relu(x@W1+b1))
    acc_cnt_ref,     # [G_pad, 1]     f32 scratch: per-graph node counts
):
    i = pl.program_id(0)
    n_steps = pl.num_programs(0)
    g_pad = sum_ref.shape[0]
    tile_n = x_ref.shape[0]

    # ---- init accumulators on the first node tile -------------------------------
    @pl.when(i == 0)
    def _init():
        sum_ref[...] = jnp.zeros_like(sum_ref)
        mean_ref[...] = jnp.zeros_like(mean_ref)
        mlp_ref[...] = jnp.zeros_like(mlp_ref)
        max_ref[...] = jnp.full_like(max_ref, -jnp.inf)
        acc_relu_ref[...] = jnp.zeros_like(acc_relu_ref)
        acc_cnt_ref[...] = jnp.zeros_like(acc_cnt_ref)

    x = x_ref[...]                                         # [tile_N, C_pad]
    b_row = batch_row_ref[...]                             # [1, tile_N]
    b_col = batch_col_ref[...]                             # [tile_N, 1]

    # ---- per-tile one-hot scatter matrix [G_pad, tile_N] -------------------------
    # Padded node rows carry an out-of-range id (== G_pad) so they match nothing.
    gids = jax.lax.broadcasted_iota(jnp.int32, (g_pad, tile_n), 0)
    onehot = (gids == b_row).astype(jnp.float32)

    # sum pool + node counts (MXU pooling, XLU lane-reduce for counts).
    sum_ref[...] += jnp.dot(onehot, x, preferred_element_type=jnp.float32)
    acc_cnt_ref[...] += jnp.sum(onehot, axis=1, keepdims=True)

    # ---- MLP layer 1 + ReLU on the node tile; pool BEFORE layer 2 ---------------
    h = jnp.dot(x, w1_ref[...], preferred_element_type=jnp.float32) + b1_ref[...]
    h = jnp.maximum(h, 0.0)
    acc_relu_ref[...] += jnp.dot(onehot, h, preferred_element_type=jnp.float32)

    # ---- max pool: per-graph masked max (G_pad is small, unrolled) --------------
    tile_rows = []
    for g in range(g_pad):
        masked = jnp.where(b_col == g, x, -jnp.inf)        # [tile_N, C_pad]
        tile_rows.append(jnp.max(masked, axis=0, keepdims=True))   # [1, C_pad]
    tile_max = jnp.concatenate(tile_rows, axis=0)          # [G_pad, C_pad]
    max_ref[...] = jnp.maximum(max_ref[...], tile_max)

    # ---- finalize on the last node tile ------------------------------------------
    @pl.when(i == n_steps - 1)
    def _finalize():
        counts = acc_cnt_ref[...]                          # [G_pad, 1]
        mean_ref[...] = sum_ref[...] / jnp.maximum(counts, 1.0)
        # second MLP linear applied to the pooled matrix + per-graph bias scaling
        mlp_ref[...] = (jnp.dot(acc_relu_ref[...], w2_ref[...],
                                preferred_element_type=jnp.float32)
                        + counts * b2_ref[...])


@functools.partial(jax.jit, static_argnames=("num_graphs", "tile_n"))
def combined_readout(x, batch, w1, b1, w2, b2, num_graphs, *, tile_n=256):
    """x: [N, C] f32, batch: [N] int graph ids, w*: [C, C] stored as W^T, b*: [C].

    Returns concat([sum, mean, max, mlp_sum], axis=1): [num_graphs, 4*C].
    """
    N, C = x.shape
    tile_n = max(128, (int(tile_n) // 128) * 128)          # batch-row lane alignment
    c_pad = _round_up(C, 128)                              # lane-dense features
    g_pad = _round_up(max(num_graphs, 1), 8)               # sublane-dense output rows
    n_pad = _round_up(N, tile_n)

    # Zero-pad features/weights; pad node ids with an out-of-range graph id.
    x_p = jnp.zeros((n_pad, c_pad), jnp.float32).at[:N, :C].set(x.astype(jnp.float32))
    batch_p = jnp.full((n_pad,), g_pad, jnp.int32).at[:N].set(batch.astype(jnp.int32))
    batch_row = batch_p.reshape(1, n_pad)
    batch_col = batch_p.reshape(n_pad, 1)

    w1_p = jnp.zeros((c_pad, c_pad), jnp.float32).at[:C, :C].set(w1.astype(jnp.float32))
    w2_p = jnp.zeros((c_pad, c_pad), jnp.float32).at[:C, :C].set(w2.astype(jnp.float32))
    b1_p = jnp.zeros((1, c_pad), jnp.float32).at[0, :C].set(b1.astype(jnp.float32))
    b2_p = jnp.zeros((1, c_pad), jnp.float32).at[0, :C].set(b2.astype(jnp.float32))

    grid = (n_pad // tile_n,)
    const_spec = lambda shape: pl.BlockSpec(shape, lambda i: (0, 0))
    out_sds = jax.ShapeDtypeStruct((g_pad, c_pad), jnp.float32)
    out_spec = pl.BlockSpec((g_pad, c_pad), lambda i: (0, 0))   # resident accumulator

    # Advisory cost estimate for XLA scheduling around the custom call.
    flops = (2 * n_pad * c_pad * c_pad            # x @ W1
             + 2 * 2 * g_pad * n_pad * c_pad      # two one-hot pooling matmuls
             + 2 * g_pad * c_pad * c_pad)         # pooled @ W2
    bytes_accessed = (n_pad * c_pad * 4 + 2 * c_pad * c_pad * 4
                      + 2 * n_pad * 4 + 4 * g_pad * c_pad * 4)

    # VMEM budget (safe on v7x's 64 MiB physical VMEM): double-buffered x tile +
    # weights + resident outputs + scratch, with 2x headroom, capped at 48 MiB.
    vmem_need = (2 * tile_n * c_pad * 4
                 + 2 * 2 * c_pad * c_pad * 4
                 + 4 * 2 * tile_n * 4
                 + 4 * g_pad * c_pad * 4
                 + (g_pad * c_pad + g_pad) * 4
                 + 4 * c_pad * 4 * 4)
    vmem_limit = int(min(48 * 1024 * 1024, max(32 * 1024 * 1024, 2 * vmem_need)))

    sum_p, mean_p, max_p, mlp_p = pl.pallas_call(
        _combined_readout_kernel,
        out_shape=(out_sds, out_sds, out_sds, out_sds),
        grid_spec=pltpu.PrefetchScalarGridSpec(
            num_scalar_prefetch=0,
            grid=grid,
            in_specs=[
                pl.BlockSpec((1, tile_n), lambda i: (0, i)),       # batch (row layout)
                pl.BlockSpec((tile_n, 1), lambda i: (i, 0)),       # batch (col layout)
                pl.BlockSpec((tile_n, c_pad), lambda i: (i, 0)),   # x node tile
                const_spec((c_pad, c_pad)),                        # W1^T (loop-invariant)
                const_spec((1, c_pad)),                            # b1
                const_spec((c_pad, c_pad)),                        # W2^T
                const_spec((1, c_pad)),                            # b2
            ],
            out_specs=(out_spec, out_spec, out_spec, out_spec),
            scratch_shapes=[
                pltpu.VMEM((g_pad, c_pad), jnp.float32),           # pooled relu(h1)
                pltpu.VMEM((g_pad, 1), jnp.float32),               # per-graph counts
            ],
        ),
        compiler_params=pltpu.CompilerParams(
            dimension_semantics=("arbitrary",),        # node axis is a reduction
            vmem_limit_bytes=vmem_limit,
        ),
        cost_estimate=pl.CostEstimate(flops=flops, transcendentals=0,
                                      bytes_accessed=bytes_accessed),
    )(batch_row, batch_col, x_p, w1_p, b1_p, w2_p, b2_p)

    # Slice off padding and concatenate in CombinedReadOut order.
    g, c = num_graphs, C
    return jnp.concatenate(
        [sum_p[:g, :c], mean_p[:g, :c], max_p[:g, :c], mlp_p[:g, :c]], axis=1)


def _reference(x, batch, w1, b1, w2, b2, num_graphs):
    sum_p = jax.ops.segment_sum(x, batch, num_segments=num_graphs)
    cnt = jax.ops.segment_sum(jnp.ones((x.shape[0], 1), jnp.float32), batch,
                              num_segments=num_graphs)
    mean_p = sum_p / jnp.maximum(cnt, 1.0)
    max_p = jax.ops.segment_max(x, batch, num_segments=num_graphs)
    h = jnp.maximum(x @ w1 + b1, 0.0) @ w2 + b2
    mlp_p = jax.ops.segment_sum(h, batch, num_segments=num_graphs)
    return jnp.concatenate([sum_p, mean_p, max_p, mlp_p], axis=1)


if __name__ == "__main__":
    key = jax.random.PRNGKey(0)
    N, C, G = 200, 32, 3   # 200 nodes, 32 channels, 3 graphs

    kx, k1, k2, k3, k4 = jax.random.split(key, 5)
    x = jax.random.normal(kx, (N, C), dtype=jnp.float32)
    # Deterministic synthetic parameters (akin to nn.Linear uniform init), stored as W^T.
    bound = 1.0 / jnp.sqrt(C)
    w1 = jax.random.uniform(k1, (C, C), jnp.float32, -bound, bound)
    b1 = jax.random.uniform(k2, (C,), jnp.float32, -bound, bound)
    w2 = jax.random.uniform(k3, (C, C), jnp.float32, -bound, bound)
    b2 = jax.random.uniform(k4, (C,), jnp.float32, -bound, bound)

    # PyG-style sorted batch vector: 70 / 60 / 70 nodes per graph.
    batch = jnp.concatenate([jnp.full((70,), 0, jnp.int32),
                             jnp.full((60,), 1, jnp.int32),
                             jnp.full((70,), 2, jnp.int32)])

    # tile_n=128 so the small demo still exercises the multi-step accumulation path.
    out = combined_readout(x, batch, w1, b1, w2, b2, G, tile_n=128)
    out = jax.block_until_ready(out)

    ref = _reference(x, batch, w1, b1, w2, b2, G)
    assert out.shape == (G, 4 * C)
    max_err = float(jnp.max(jnp.abs(out - ref)))
    assert jnp.allclose(out, ref, atol=1e-3, rtol=1e-3), max_err
    print("KERNEL_OK")
</pallas_src>

<mosaic_0001>
module attributes {stable_mosaic.version = 11 : i64} {
  func.func @_combined_readout_kernel(%arg0: i32, %arg1: memref<1x128xi32, #tpu.memory_space<vmem>>, %arg2: memref<128x1xi32, #tpu.memory_space<vmem>>, %arg3: memref<128x128xf32, #tpu.memory_space<vmem>>, %arg4: memref<128x128xf32, #tpu.memory_space<vmem>>, %arg5: memref<1x128xf32, #tpu.memory_space<vmem>>, %arg6: memref<128x128xf32, #tpu.memory_space<vmem>>, %arg7: memref<1x128xf32, #tpu.memory_space<vmem>>, %arg8: memref<8x128xf32, #tpu.memory_space<vmem>>, %arg9: memref<8x128xf32, #tpu.memory_space<vmem>>, %arg10: memref<8x128xf32, #tpu.memory_space<vmem>>, %arg11: memref<8x128xf32, #tpu.memory_space<vmem>>, %arg12: memref<8x128xf32, #tpu.memory_space<vmem>>, %arg13: memref<8x1xf32, #tpu.memory_space<vmem>>) attributes {dimension_semantics = [#tpu.dimension_semantics<arbitrary>], iteration_bounds = array<i64: 2>, scalar_prefetch = 0 : i64, scratch_operands = 2 : i64, tpu.core_type = #tpu.core_type<tc>, window_params = [{transform_indices = @transform_0, window_bounds = array<i64: 1, 128>}, {transform_indices = @transform_1, window_bounds = array<i64: 128, 1>}, {transform_indices = @transform_2, window_bounds = array<i64: 128, 128>}, {pipeline_mode = #tpu.pipeline_mode<synchronous>, transform_indices = @transform_3, window_bounds = array<i64: 128, 128>}, {pipeline_mode = #tpu.pipeline_mode<synchronous>, transform_indices = @transform_4, window_bounds = array<i64: 1, 128>}, {pipeline_mode = #tpu.pipeline_mode<synchronous>, transform_indices = @transform_5, window_bounds = array<i64: 128, 128>}, {pipeline_mode = #tpu.pipeline_mode<synchronous>, transform_indices = @transform_6, window_bounds = array<i64: 1, 128>}, {pipeline_mode = #tpu.pipeline_mode<synchronous>, transform_indices = @transform_7, window_bounds = array<i64: 8, 128>}, {pipeline_mode = #tpu.pipeline_mode<synchronous>, transform_indices = @transform_8, window_bounds = array<i64: 8, 128>}, {pipeline_mode = #tpu.pipeline_mode<synchronous>, transform_indices = @transform_9, window_bounds = array<i64: 8, 128>}, {pipeline_mode = #tpu.pipeline_mode<synchronous>, transform_indices = @transform_10, window_bounds = array<i64: 8, 128>}]} {
    %c0_i32 = arith.constant 0 : i32
    %0 = arith.cmpi eq, %arg0, %c0_i32 : i32
    %1 = arith.extui %0 : i1 to i32
    %c0_i32_0 = arith.constant 0 : i32
    %2 = arith.cmpi ne, %1, %c0_i32_0 : i32
    scf.if %2 {
      %cst_49 = arith.constant 0.000000e+00 : f32
      %102 = vector.broadcast %cst_49 : f32 to vector<8x128xf32>
      %c0_50 = arith.constant 0 : index
      %c0_51 = arith.constant 0 : index
      %103 = vector.load %arg8[%c0_50, %c0_51] : memref<8x128xf32, #tpu.memory_space<vmem>>, vector<8x128xf32>
      tpu.vector_store %arg8[%c0_50, %c0_51], %102 {strides = array<i32>} : memref<8x128xf32, #tpu.memory_space<vmem>>, vector<8x128xf32>,
      %cst_52 = arith.constant 0.000000e+00 : f32
      %104 = vector.broadcast %cst_52 : f32 to vector<8x128xf32>
      %c0_53 = arith.constant 0 : index
      %c0_54 = arith.constant 0 : index
      %105 = vector.load %arg9[%c0_53, %c0_54] : memref<8x128xf32, #tpu.memory_space<vmem>>, vector<8x128xf32>
      tpu.vector_store %arg9[%c0_53, %c0_54], %104 {strides = array<i32>} : memref<8x128xf32, #tpu.memory_space<vmem>>, vector<8x128xf32>,
      %cst_55 = arith.constant 0.000000e+00 : f32
      %106 = vector.broadcast %cst_55 : f32 to vector<8x128xf32>
      %c0_56 = arith.constant 0 : index
      %c0_57 = arith.constant 0 : index
      %107 = vector.load %arg11[%c0_56, %c0_57] : memref<8x128xf32, #tpu.memory_space<vmem>>, vector<8x128xf32>
      tpu.vector_store %arg11[%c0_56, %c0_57], %106 {strides = array<i32>} : memref<8x128xf32, #tpu.memory_space<vmem>>, vector<8x128xf32>,
      %cst_58 = arith.constant 0xFF800000 : f32
      %108 = vector.broadcast %cst_58 : f32 to vector<8x128xf32>
      %c0_59 = arith.constant 0 : index
      %c0_60 = arith.constant 0 : index
      %109 = vector.load %arg10[%c0_59, %c0_60] : memref<8x128xf32, #tpu.memory_space<vmem>>, vector<8x128xf32>
      tpu.vector_store %arg10[%c0_59, %c0_60], %108 {strides = array<i32>} : memref<8x128xf32, #tpu.memory_space<vmem>>, vector<8x128xf32>,
      %cst_61 = arith.constant 0.000000e+00 : f32
      %110 = vector.broadcast %cst_61 : f32 to vector<8x128xf32>
      %c0_62 = arith.constant 0 : index
      %c0_63 = arith.constant 0 : index
      %111 = vector.load %arg12[%c0_62, %c0_63] : memref<8x128xf32, #tpu.memory_space<vmem>>, vector<8x128xf32>
      tpu.vector_store %arg12[%c0_62, %c0_63], %110 {strides = array<i32>} : memref<8x128xf32, #tpu.memory_space<vmem>>, vector<8x128xf32>,
      %cst_64 = arith.constant 0.000000e+00 : f32
      %112 = vector.broadcast %cst_64 : f32 to vector<8x1xf32>
      %c0_65 = arith.constant 0 : index
      %c0_66 = arith.constant 0 : index
      %113 = vector.load %arg13[%c0_65, %c0_66] : memref<8x1xf32, #tpu.memory_space<vmem>>, vector<8x1xf32>
      tpu.vector_store %arg13[%c0_65, %c0_66], %112 {strides = array<i32>} : memref<8x1xf32, #tpu.memory_space<vmem>>, vector<8x1xf32>,
    } else {
    }
    %c0 = arith.constant 0 : index
    %c0_1 = arith.constant 0 : index
    %3 = vector.load %arg3[%c0, %c0_1] : memref<128x128xf32, #tpu.memory_space<vmem>>, vector<128x128xf32>
    %c0_2 = arith.constant 0 : index
    %c0_3 = arith.constant 0 : index
    %4 = vector.load %arg1[%c0_2, %c0_3] : memref<1x128xi32, #tpu.memory_space<vmem>>, vector<1x128xi32>
    %c0_4 = arith.constant 0 : index
    %c0_5 = arith.constant 0 : index
    %5 = vector.load %arg2[%c0_4, %c0_5] : memref<128x1xi32, #tpu.memory_space<vmem>>, vector<128x1xi32>
    %6 = tpu.iota {dimensions = array<i32: 0>} : vector<8x128xi32>
    %7 = vector.broadcast %4 : vector<1x128xi32> to vector<8x128xi32>
    %8 = arith.cmpi eq, %6, %7 : vector<8x128xi32>
    %9 = arith.extui %8 : vector<8x128xi1> to vector<8x128xi32>
    %10 = arith.sitofp %9 : vector<8x128xi32> to vector<8x128xf32>
    %c0_6 = arith.constant 0 : index
    %c0_7 = arith.constant 0 : index
    %11 = vector.load %arg8[%c0_6, %c0_7] : memref<8x128xf32, #tpu.memory_space<vmem>>, vector<8x128xf32>
    %cst = arith.constant dense<0.000000e+00> : vector<8x128xf32>
    %12 = tpu.matmul %10, %3, %cst {dimension_numbers = #tpu.dot_dimension_numbers<[1], [0], [0], [1], [0, 0, 1, 1], [], []>} : vector<8x128xf32>, vector<128x128xf32>, vector<8x128xf32> -> vector<8x128xf32>
    %13 = arith.addf %11, %12 : vector<8x128xf32>
    %c0_8 = arith.constant 0 : index
    %c0_9 = arith.constant 0 : index
    %14 = vector.load %arg8[%c0_8, %c0_9] : memref<8x128xf32, #tpu.memory_space<vmem>>, vector<8x128xf32>
    tpu.vector_store %arg8[%c0_8, %c0_9], %13 {strides = array<i32>} : memref<8x128xf32, #tpu.memory_space<vmem>>, vector<8x128xf32>,
    %c0_10 = arith.constant 0 : index
    %c0_11 = arith.constant 0 : index
    %15 = vector.load %arg13[%c0_10, %c0_11] : memref<8x1xf32, #tpu.memory_space<vmem>>, vector<8x1xf32>
    %cst_12 = arith.constant dense<0.000000e+00> : vector<8xf32>
    %16 = vector.multi_reduction <add>, %10, %cst_12 [1] : vector<8x128xf32> to vector<8xf32>
    %17 = vector.shape_cast %16 : vector<8xf32> to vector<8x1xf32>
    %18 = arith.addf %15, %17 : vector<8x1xf32>
    %c0_13 = arith.constant 0 : index
    %c0_14 = arith.constant 0 : index
    %19 = vector.load %arg13[%c0_13, %c0_14] : memref<8x1xf32, #tpu.memory_space<vmem>>, vector<8x1xf32>
    tpu.vector_store %arg13[%c0_13, %c0_14], %18 {strides = array<i32>} : memref<8x1xf32, #tpu.memory_space<vmem>>, vector<8x1xf32>,
    %c0_15 = arith.constant 0 : index
    %c0_16 = arith.constant 0 : index
    %20 = vector.load %arg4[%c0_15, %c0_16] : memref<128x128xf32, #tpu.memory_space<vmem>>, vector<128x128xf32>
    %cst_17 = arith.constant dense<0.000000e+00> : vector<128x128xf32>
    %21 = tpu.matmul %3, %20, %cst_17 {dimension_numbers = #tpu.dot_dimension_numbers<[1], [0], [0], [1], [0, 0, 1, 1], [], []>} : vector<128x128xf32>, vector<128x128xf32>, vector<128x128xf32> -> vector<128x128xf32>
    %c0_18 = arith.constant 0 : index
    %c0_19 = arith.constant 0 : index
    %22 = vector.load %arg5[%c0_18, %c0_19] : memref<1x128xf32, #tpu.memory_space<vmem>>, vector<1x128xf32>
    %23 = vector.broadcast %22 : vector<1x128xf32> to vector<128x128xf32>
    %24 = arith.addf %21, %23 : vector<128x128xf32>
    %cst_20 = arith.constant 0.000000e+00 : f32
    %25 = vector.broadcast %cst_20 : f32 to vector<128x128xf32>
    %26 = arith.maximumf %24, %25 : vector<128x128xf32>
    %c0_21 = arith.constant 0 : index
    %c0_22 = arith.constant 0 : index
    %27 = vector.load %arg12[%c0_21, %c0_22] : memref<8x128xf32, #tpu.memory_space<vmem>>, vector<8x128xf32>
    %cst_23 = arith.constant dense<0.000000e+00> : vector<8x128xf32>
    %28 = tpu.matmul %10, %26, %cst_23 {dimension_numbers = #tpu.dot_dimension_numbers<[1], [0], [0], [1], [0, 0, 1, 1], [], []>} : vector<8x128xf32>, vector<128x128xf32>, vector<8x128xf32> -> vector<8x128xf32>
    %29 = arith.addf %27, %28 : vector<8x128xf32>
    %c0_24 = arith.constant 0 : index
    %c0_25 = arith.constant 0 : index
    %30 = vector.load %arg12[%c0_24, %c0_25] : memref<8x128xf32, #tpu.memory_space<vmem>>, vector<8x128xf32>
    tpu.vector_store %arg12[%c0_24, %c0_25], %29 {strides = array<i32>} : memref<8x128xf32, #tpu.memory_space<vmem>>, vector<8x128xf32>,
    %c0_i32_26 = arith.constant 0 : i32
    %31 = vector.broadcast %c0_i32_26 : i32 to vector<128x1xi32>
    %32 = arith.cmpi eq, %5, %31 : vector<128x1xi32>
    %cst_27 = arith.constant 0xFF800000 : f32
    %33 = vector.shape_cast %32 : vector<128x1xi1> to vector<128x1xi1>
    %34 = vector.broadcast %33 : vector<128x1xi1> to vector<128x128xi1>
    %35 = vector.broadcast %cst_27 : f32 to vector<128x128xf32>
    %36 = arith.select %34, %3, %35 : vector<128x128xi1>, vector<128x128xf32>
    %cst_28 = arith.constant dense<0xFF800000> : vector<128xf32>
    %37 = vector.multi_reduction <maximumf>, %36, %cst_28 [0] : vector<128x128xf32> to vector<128xf32>
    %38 = vector.shape_cast %37 : vector<128xf32> to vector<1x128xf32>
    %c1_i32 = arith.constant 1 : i32
    %39 = vector.broadcast %c1_i32 : i32 to vector<128x1xi32>
    %40 = arith.cmpi eq, %5, %39 : vector<128x1xi32>
    %cst_29 = arith.constant 0xFF800000 : f32
    %41 = vector.shape_cast %40 : vector<128x1xi1> to vector<128x1xi1>
    %42 = vector.broadcast %41 : vector<128x1xi1> to vector<128x128xi1>
    %43 = vector.broadcast %cst_29 : f32 to vector<128x128xf32>
    %44 = arith.select %42, %3, %43 : vector<128x128xi1>, vector<128x128xf32>
    %cst_30 = arith.constant dense<0xFF800000> : vector<128xf32>
    %45 = vector.multi_reduction <maximumf>, %44, %cst_30 [0] : vector<128x128xf32> to vector<128xf32>
    %46 = vector.shape_cast %45 : vector<128xf32> to vector<1x128xf32>
    %c2_i32 = arith.constant 2 : i32
    %47 = vector.broadcast %c2_i32 : i32 to vector<128x1xi32>
    %48 = arith.cmpi eq, %5, %47 : vector<128x1xi32>
    %cst_31 = arith.constant 0xFF800000 : f32
    %49 = vector.shape_cast %48 : vector<128x1xi1> to vector<128x1xi1>
    %50 = vector.broadcast %49 : vector<128x1xi1> to vector<128x128xi1>
    %51 = vector.broadcast %cst_31 : f32 to vector<128x128xf32>
    %52 = arith.select %50, %3, %51 : vector<128x128xi1>, vector<128x128xf32>
    %cst_32 = arith.constant dense<0xFF800000> : vector<128xf32>
    %53 = vector.multi_reduction <maximumf>, %52, %cst_32 [0] : vector<128x128xf32> to vector<128xf32>
    %54 = vector.shape_cast %53 : vector<128xf32> to vector<1x128xf32>
    %c3_i32 = arith.constant 3 : i32
    %55 = vector.broadcast %c3_i32 : i32 to vector<128x1xi32>
    %56 = arith.cmpi eq, %5, %55 : vector<128x1xi32>
    %cst_33 = arith.constant 0xFF800000 : f32
    %57 = vector.shape_cast %56 : vector<128x1xi1> to vector<128x1xi1>
    %58 = vector.broadcast %57 : vector<128x1xi1> to vector<128x128xi1>
    %59 = vector.broadcast %cst_33 : f32 to vector<128x128xf32>
    %60 = arith.select %58, %3, %59 : vector<128x128xi1>, vector<128x128xf32>
    %cst_34 = arith.constant dense<0xFF800000> : vector<128xf32>
    %61 = vector.multi_reduction <maximumf>, %60, %cst_34 [0] : vector<128x128xf32> to vector<128xf32>
    %62 = vector.shape_cast %61 : vector<128xf32> to vector<1x128xf32>
    %c4_i32 = arith.constant 4 : i32
    %63 = vector.broadcast %c4_i32 : i32 to vector<128x1xi32>
    %64 = arith.cmpi eq, %5, %63 : vector<128x1xi32>
    %cst_35 = arith.constant 0xFF800000 : f32
    %65 = vector.shape_cast %64 : vector<128x1xi1> to vector<128x1xi1>
    %66 = vector.broadcast %65 : vector<128x1xi1> to vector<128x128xi1>
    %67 = vector.broadcast %cst_35 : f32 to vector<128x128xf32>
    %68 = arith.select %66, %3, %67 : vector<128x128xi1>, vector<128x128xf32>
    %cst_36 = arith.constant dense<0xFF800000> : vector<128xf32>
    %69 = vector.multi_reduction <maximumf>, %68, %cst_36 [0] : vector<128x128xf32> to vector<128xf32>
    %70 = vector.shape_cast %69 : vector<128xf32> to vector<1x128xf32>
    %c5_i32 = arith.constant 5 : i32
    %71 = vector.broadcast %c5_i32 : i32 to vector<128x1xi32>
    %72 = arith.cmpi eq, %5, %71 : vector<128x1xi32>
    %cst_37 = arith.constant 0xFF800000 : f32
    %73 = vector.shape_cast %72 : vector<128x1xi1> to vector<128x1xi1>
    %74 = vector.broadcast %73 : vector<128x1xi1> to vector<128x128xi1>
    %75 = vector.broadcast %cst_37 : f32 to vector<128x128xf32>
    %76 = arith.select %74, %3, %75 : vector<128x128xi1>, vector<128x128xf32>
    %cst_38 = arith.constant dense<0xFF800000> : vector<128xf32>
    %77 = vector.multi_reduction <maximumf>, %76, %cst_38 [0] : vector<128x128xf32> to vector<128xf32>
    %78 = vector.shape_cast %77 : vector<128xf32> to vector<1x128xf32>
    %c6_i32 = arith.constant 6 : i32
    %79 = vector.broadcast %c6_i32 : i32 to vector<128x1xi32>
    %80 = arith.cmpi eq, %5, %79 : vector<128x1xi32>
    %cst_39 = arith.constant 0xFF800000 : f32
    %81 = vector.shape_cast %80 : vector<128x1xi1> to vector<128x1xi1>
    %82 = vector.broadcast %81 : vector<128x1xi1> to vector<128x128xi1>
    %83 = vector.broadcast %cst_39 : f32 to vector<128x128xf32>
    %84 = arith.select %82, %3, %83 : vector<128x128xi1>, vector<128x128xf32>
    %cst_40 = arith.constant dense<0xFF800000> : vector<128xf32>
    %85 = vector.multi_reduction <maximumf>, %84, %cst_40 [0] : vector<128x128xf32> to vector<128xf32>
    %86 = vector.shape_cast %85 : vector<128xf32> to vector<1x128xf32>
    %c7_i32 = arith.constant 7 : i32
    %87 = vector.broadcast %c7_i32 : i32 to vector<128x1xi32>
    %88 = arith.cmpi eq, %5, %87 : vector<128x1xi32>
    %cst_41 = arith.constant 0xFF800000 : f32
    %89 = vector.shape_cast %88 : vector<128x1xi1> to vector<128x1xi1>
    %90 = vector.broadcast %89 : vector<128x1xi1> to vector<128x128xi1>
    %91 = vector.broadcast %cst_41 : f32 to vector<128x128xf32>
    %92 = arith.select %90, %3, %91 : vector<128x128xi1>, vector<128x128xf32>
    %cst_42 = arith.constant dense<0xFF800000> : vector<128xf32>
    %93 = vector.multi_reduction <maximumf>, %92, %cst_42 [0] : vector<128x128xf32> to vector<128xf32>
    %94 = vector.shape_cast %93 : vector<128xf32> to vector<1x128xf32>
    %95 = tpu.concatenate %38, %46, %54, %62, %70, %78, %86, %94 in 0 : vector<1x128xf32>, vector<1x128xf32>, vector<1x128xf32>, vector<1x128xf32>, vector<1x128xf32>, vector<1x128xf32>, vector<1x128xf32>, vector<1x128xf32> -> vector<8x128xf32>
    %c0_43 = arith.constant 0 : index
    %c0_44 = arith.constant 0 : index
    %96 = vector.load %arg10[%c0_43, %c0_44] : memref<8x128xf32, #tpu.memory_space<vmem>>, vector<8x128xf32>
    %97 = arith.maximumf %96, %95 : vector<8x128xf32>
    %c0_45 = arith.constant 0 : index
    %c0_46 = arith.constant 0 : index
    %98 = vector.load %arg10[%c0_45, %c0_46] : memref<8x128xf32, #tpu.memory_space<vmem>>, vector<8x128xf32>
    tpu.vector_store %arg10[%c0_45, %c0_46], %97 {strides = array<i32>} : memref<8x128xf32, #tpu.memory_space<vmem>>, vector<8x128xf32>,
    %c1_i32_47 = arith.constant 1 : i32
    %99 = arith.cmpi eq, %arg0, %c1_i32_47 : i32
    %100 = arith.extui %99 : i1 to i32
    %c0_i32_48 = arith.constant 0 : i32
    %101 = arith.cmpi ne, %100, %c0_i32_48 : i32
    scf.if %101 {
      %c0_49 = arith.constant 0 : index
      %c0_50 = arith.constant 0 : index
      %102 = vector.load %arg13[%c0_49, %c0_50] : memref<8x1xf32, #tpu.memory_space<vmem>>, vector<8x1xf32>
      %c0_51 = arith.constant 0 : index
      %c0_52 = arith.constant 0 : index
      %103 = vector.load %arg8[%c0_51, %c0_52] : memref<8x128xf32, #tpu.memory_space<vmem>>, vector<8x128xf32>
      %cst_53 = arith.constant 1.000000e+00 : f32
      %104 = vector.broadcast %cst_53 : f32 to vector<8x1xf32>
      %105 = arith.maximumf %102, %104 : vector<8x1xf32>
      %106 = vector.broadcast %105 : vector<8x1xf32> to vector<8x128xf32>
      %107 = arith.divf %103, %106 : vector<8x128xf32>
      %c0_54 = arith.constant 0 : index
      %c0_55 = arith.constant 0 : index
      %108 = vector.load %arg9[%c0_54, %c0_55] : memref<8x128xf32, #tpu.memory_space<vmem>>, vector<8x128xf32>
      tpu.vector_store %arg9[%c0_54, %c0_55], %107 {strides = array<i32>} : memref<8x128xf32, #tpu.memory_space<vmem>>, vector<8x128xf32>,
      %c0_56 = arith.constant 0 : index
      %c0_57 = arith.constant 0 : index
      %109 = vector.load %arg12[%c0_56, %c0_57] : memref<8x128xf32, #tpu.memory_space<vmem>>, vector<8x128xf32>
      %c0_58 = arith.constant 0 : index
      %c0_59 = arith.constant 0 : index
      %110 = vector.load %arg6[%c0_58, %c0_59] : memref<128x128xf32, #tpu.memory_space<vmem>>, vector<128x128xf32>
      %cst_60 = arith.constant dense<0.000000e+00> : vector<8x128xf32>
      %111 = tpu.matmul %109, %110, %cst_60 {dimension_numbers = #tpu.dot_dimension_numbers<[1], [0], [0], [1], [0, 0, 1, 1], [], []>} : vector<8x128xf32>, vector<128x128xf32>, vector<8x128xf32> -> vector<8x128xf32>
      %c0_61 = arith.constant 0 : index
      %c0_62 = arith.constant 0 : index
      %112 = vector.load %arg7[%c0_61, %c0_62] : memref<1x128xf32, #tpu.memory_space<vmem>>, vector<1x128xf32>
      %113 = vector.broadcast %102 : vector<8x1xf32> to vector<8x128xf32>
      %114 = vector.broadcast %112 : vector<1x128xf32> to vector<8x128xf32>
      %115 = arith.mulf %113, %114 : vector<8x128xf32>
      %116 = arith.addf %111, %115 : vector<8x128xf32>
      %c0_63 = arith.constant 0 : index
      %c0_64 = arith.constant 0 : index
      %117 = vector.load %arg11[%c0_63, %c0_64] : memref<8x128xf32, #tpu.memory_space<vmem>>, vector<8x128xf32>
      tpu.vector_store %arg11[%c0_63, %c0_64], %116 {strides = array<i32>} : memref<8x128xf32, #tpu.memory_space<vmem>>, vector<8x128xf32>,
    } else {
    }
    return
  }
  func.func @transform_0(%arg0: i32) -> (i32, i32) {
    %c0_i32 = arith.constant 0 : i32
    %c0_i32_0 = arith.constant 0 : i32
    return %c0_i32, %arg0 : i32, i32
  }
  func.func @transform_1(%arg0: i32) -> (i32, i32) {
    %c0_i32 = arith.constant 0 : i32
    %c0_i32_0 = arith.constant 0 : i32
    return %arg0, %c0_i32 : i32, i32
  }
  func.func @transform_2(%arg0: i32) -> (i32, i32) {
    %c0_i32 = arith.constant 0 : i32
    %c0_i32_0 = arith.constant 0 : i32
    return %arg0, %c0_i32 : i32, i32
  }
  func.func @transform_3(%arg0: i32) -> (i32, i32) {
    %c0_i32 = arith.constant 0 : i32
    %c0_i32_0 = arith.constant 0 : i32
    %c0_i32_1 = arith.constant 0 : i32
    return %c0_i32, %c0_i32_0 : i32, i32
  }
  func.func @transform_4(%arg0: i32) -> (i32, i32) {
    %c0_i32 = arith.constant 0 : i32
    %c0_i32_0 = arith.constant 0 : i32
    %c0_i32_1 = arith.constant 0 : i32
    return %c0_i32, %c0_i32_0 : i32, i32
  }
  func.func @transform_5(%arg0: i32) -> (i32, i32) {
    %c0_i32 = arith.constant 0 : i32
    %c0_i32_0 = arith.constant 0 : i32
    %c0_i32_1 = arith.constant 0 : i32
    return %c0_i32, %c0_i32_0 : i32, i32
  }
  func.func @transform_6(%arg0: i32) -> (i32, i32) {
    %c0_i32 = arith.constant 0 : i32
    %c0_i32_0 = arith.constant 0 : i32
    %c0_i32_1 = arith.constant 0 : i32
    return %c0_i32, %c0_i32_0 : i32, i32
  }
  func.func @transform_7(%arg0: i32) -> (i32, i32) {
    %c0_i32 = arith.constant 0 : i32
    %c0_i32_0 = arith.constant 0 : i32
    %c0_i32_1 = arith.constant 0 : i32
    return %c0_i32, %c0_i32_0 : i32, i32
  }
  func.func @transform_8(%arg0: i32) -> (i32, i32) {
    %c0_i32 = arith.constant 0 : i32
    %c0_i32_0 = arith.constant 0 : i32
    %c0_i32_1 = arith.constant 0 : i32
    return %c0_i32, %c0_i32_0 : i32, i32
  }
  func.func @transform_9(%arg0: i32) -> (i32, i32) {
    %c0_i32 = arith.constant 0 : i32
    %c0_i32_0 = arith.constant 0 : i32
    %c0_i32_1 = arith.constant 0 : i32
    return %c0_i32, %c0_i32_0 : i32, i32
  }
  func.func @transform_10(%arg0: i32) -> (i32, i32) {
    %c0_i32 = arith.constant 0 : i32
    %c0_i32_0 = arith.constant 0 : i32
    %c0_i32_1 = arith.constant 0 : i32
    return %c0_i32, %c0_i32_0 : i32, i32
  }
}

</mosaic_0001>

<llo_original>
// kernel: combined_readout.1
$region0: #{combined_readout.1}
  #allocation0 [shape = 'u32[]', space=smem, size = 0x4, offset = 0x4, fixed_abs, tag = 'smem constant byte address 0x4 - core index']
  #allocation1 [shape = 'u32[144,128]{1,0:T(1,128)}', space=vmem, size = 0x12000, scoped, tag = 'internal scratch']
  #allocation2 [shape = 'f32[8,128]{1,0:T(8,128)}', space=vmem, size = 0x1000, scoped, tag = 'scratch operand']
  #allocation3 [shape = 'f32[8,1]{1,0:T(8,128)}', space=vmem, size = 0x1000, scoped, tag = 'scratch operand']
  %s0 = inlined_call_operand.vmem [shape: s32[1,256], index: 0, kind: input, shape index: {}]
  %s1 = inlined_call_operand.vmem [shape: s32[256,1], index: 1, kind: input, shape index: {}]
  %s2 = inlined_call_operand.vmem [shape: f32[256,128], index: 2, kind: input, shape index: {}]
  %s3 = inlined_call_operand.vmem [shape: f32[128,128], index: 3, kind: input, shape index: {}]
  %s4 = inlined_call_operand.vmem [shape: f32[1,128], index: 4, kind: input, shape index: {}]
  %s5 = inlined_call_operand.vmem [shape: f32[128,128], index: 5, kind: input, shape index: {}]
  %s6 = inlined_call_operand.vmem [shape: f32[1,128], index: 6, kind: input, shape index: {}]
  %s7 = inlined_call_operand.vmem [shape: f32[8,128], index: 7, kind: output, shape index: {0}]
  %s8 = inlined_call_operand.vmem [shape: f32[8,128], index: 8, kind: output, shape index: {1}]
  %s9 = inlined_call_operand.vmem [shape: f32[8,128], index: 9, kind: output, shape index: {2}]
  %s10 = inlined_call_operand.vmem [shape: f32[8,128], index: 10, kind: output, shape index: {3}]
  %11 = xla_tuple %s7, %s8, %s9, %s10
  %s12 = sld [smem:[#allocation0]]
  $region93: #{combined_readout.1} parent=0
    _
  %s14 = ssub.s32 1, %s12
  %s15 = scalar_select 0, %s14, %s12
  loop: start=0, step=1, limit=4
  $region2: #{combined_readout.1} parent=0 // loop_pre_header
    _
  $region3: #{combined_readout.1} parent=0 // loop_header
    %s17 = sphi 0, %s21
    %p18 = scmp.ge.s32.totalorder %s17, 4
    %s27 = sphi 0, %s29
    %s30 = sphi 0, %s27
    %s31 = sphi 0, %s30
    %s47 = sphi 0, %s31
    %s53 = sphi 0, %s55
    %s56 = sphi 0, %s53
    %s57 = sphi 0, %s56
    %s73 = sphi 0, %s57
    %s79 = sphi 0, %s81
    %s82 = sphi 0, %s79
    %s83 = sphi 0, %s82
    %s99 = sphi 0, %s83
    %s103 = sphi 0, %s103
    %s105 = sphi 0, %s103
    %s106 = sphi 0, %s105
    %s120 = sphi 0, %s106
    %s124 = sphi 0, %s124
    %s126 = sphi 0, %s124
    %s127 = sphi 0, %s126
    %s141 = sphi 0, %s127
    %s145 = sphi 0, %s145
    %s147 = sphi 0, %s145
    %s148 = sphi 0, %s147
    %s162 = sphi 0, %s148
    %s166 = sphi 0, %s166
    %s168 = sphi 0, %s166
    %s169 = sphi 0, %s168
    %s183 = sphi 0, %s169
    %s187 = sphi 0, %s187
    %s189 = sphi 0, %s187
    %s190 = sphi 0, %s189
    %s204 = sphi 0, %s190
    %s208 = sphi 0, %s208
    %s210 = sphi 0, %s208
    %s211 = sphi 0, %s210
    %s225 = sphi 0, %s211
    %s229 = sphi 0, %s229
    %s231 = sphi 0, %s229
    %s232 = sphi 0, %s231
    %s246 = sphi 0, %s232
    %s250 = sphi 0, %s250
    %s252 = sphi 0, %s250
    %s253 = sphi 0, %s252
    %s267 = sphi 0, %s253
  $region4: #{combined_readout.1} parent=0 // loop_header_branch
    %20 = sbr.rel (%p18) target = $region8
  $region5: #{combined_readout.1} parent=0 // loop_body
    %s22 = ssub.s32 %s17, 1
    %s23 = ssub.s32 %s17, 2
    %s24 = sadd.s32 %s17, 1
    %s25 = ssub.s32 %s17, %s24
    %p26 = scmp.eq.s32.totalorder %s25, 0
    %s28 = sadd.s32 %s27, 1
    %s29 = scalar_select %p26, %s27, %s28
    %p32 = pneg %p26
    %p33 = scmp.eq.s32.totalorder %s17, 1
    %p34 = por %p32, %p33
    %p35 = scmp.ne.s32.totalorder %s27, %s30
    %p36 = scmp.eq.s32.totalorder %s17, 0
    %p37 = por %p35, %p36
    %p38 = scmp.ne.s32.totalorder %s27, %s30
    %p39 = scmp.eq.s32.totalorder %s22, 1
    %p40 = por %p38, %p39
    %p41 = scmp.ne.s32.totalorder %s30, %s31
    %p42 = scmp.eq.s32.totalorder %s22, 0
    %p43 = por %p41, %p42
    %p44 = scmp.ne.s32.totalorder %s30, %s31
    %p45 = scmp.eq.s32.totalorder %s23, 1
    %p46 = por %p44, %p45
    %p48 = scmp.ne.s32.totalorder %s31, %s47
    %p49 = scmp.eq.s32.totalorder %s23, 0
    %p50 = por %p48, %p49
    %s51 = ssub.s32 %s17, %s24
    %p52 = scmp.eq.s32.totalorder %s51, 0
    %s54 = sadd.s32 %s53, 1
    %s55 = scalar_select %p52, %s53, %s54
    %p58 = pneg %p52
    %p59 = scmp.eq.s32.totalorder %s17, 1
    %p60 = por %p58, %p59
    %p61 = scmp.ne.s32.totalorder %s53, %s56
    %p62 = scmp.eq.s32.totalorder %s17, 0
    %p63 = por %p61, %p62
    %p64 = scmp.ne.s32.totalorder %s53, %s56
    %p65 = scmp.eq.s32.totalorder %s22, 1
    %p66 = por %p64, %p65
    %p67 = scmp.ne.s32.totalorder %s56, %s57
    %p68 = scmp.eq.s32.totalorder %s22, 0
    %p69 = por %p67, %p68
    %p70 = scmp.ne.s32.totalorder %s56, %s57
    %p71 = scmp.eq.s32.totalorder %s23, 1
    %p72 = por %p70, %p71
    %p74 = scmp.ne.s32.totalorder %s57, %s73
    %p75 = scmp.eq.s32.totalorder %s23, 0
    %p76 = por %p74, %p75
    %s77 = ssub.s32 %s17, %s24
    %p78 = scmp.eq.s32.totalorder %s77, 0
    %s80 = sadd.s32 %s79, 1
    %s81 = scalar_select %p78, %s79, %s80
    %p84 = pneg %p78
    %p85 = scmp.eq.s32.totalorder %s17, 1
    %p86 = por %p84, %p85
    %p87 = scmp.ne.s32.totalorder %s79, %s82
    %p88 = scmp.eq.s32.totalorder %s17, 0
    %p89 = por %p87, %p88
    %p90 = scmp.ne.s32.totalorder %s79, %s82
    %p91 = scmp.eq.s32.totalorder %s22, 1
    %p92 = por %p90, %p91
    %p93 = scmp.ne.s32.totalorder %s82, %s83
    %p94 = scmp.eq.s32.totalorder %s22, 0
    %p95 = por %p93, %p94
    %p96 = scmp.ne.s32.totalorder %s82, %s83
    %p97 = scmp.eq.s32.totalorder %s23, 1
    %p98 = por %p96, %p97
    %p100 = scmp.ne.s32.totalorder %s83, %s99
    %p101 = scmp.eq.s32.totalorder %s23, 0
    %p102 = por %p100, %p101
    %s104 = sadd.s32 %s103, 1
    %p107 = scmp.eq.s32.totalorder %s17, 1
    %p108 = scmp.ne.s32.totalorder %s103, %s105
    %p109 = scmp.eq.s32.totalorder %s17, 0
    %p110 = por %p108, %p109
    %p111 = scmp.ne.s32.totalorder %s103, %s105
    %p112 = scmp.eq.s32.totalorder %s22, 1
    %p113 = por %p111, %p112
    %p114 = scmp.ne.s32.totalorder %s105, %s106
    %p115 = scmp.eq.s32.totalorder %s22, 0
    %p116 = por %p114, %p115
    %p117 = scmp.ne.s32.totalorder %s105, %s106
    %p118 = scmp.eq.s32.totalorder %s23, 1
    %p119 = por %p117, %p118
    %p121 = scmp.ne.s32.totalorder %s106, %s120
    %p122 = scmp.eq.s32.totalorder %s23, 0
    %p123 = por %p121, %p122
    %s125 = sadd.s32 %s124, 1
    %p128 = scmp.eq.s32.totalorder %s17, 1
    %p129 = scmp.ne.s32.totalorder %s124, %s126
    %p130 = scmp.eq.s32.totalorder %s17, 0
    %p131 = por %p129, %p130
    %p132 = scmp.ne.s32.totalorder %s124, %s126
    %p133 = scmp.eq.s32.totalorder %s22, 1
    %p134 = por %p132, %p133
    %p135 = scmp.ne.s32.totalorder %s126, %s127
    %p136 = scmp.eq.s32.totalorder %s22, 0
    %p137 = por %p135, %p136
    %p138 = scmp.ne.s32.totalorder %s126, %s127
    %p139 = scmp.eq.s32.totalorder %s23, 1
    %p140 = por %p138, %p139
    %p142 = scmp.ne.s32.totalorder %s127, %s141
    %p143 = scmp.eq.s32.totalorder %s23, 0
    %p144 = por %p142, %p143
    %s146 = sadd.s32 %s145, 1
    %p149 = scmp.eq.s32.totalorder %s17, 1
    %p150 = scmp.ne.s32.totalorder %s145, %s147
    %p151 = scmp.eq.s32.totalorder %s17, 0
    %p152 = por %p150, %p151
    %p153 = scmp.ne.s32.totalorder %s145, %s147
    %p154 = scmp.eq.s32.totalorder %s22, 1
    %p155 = por %p153, %p154
    %p156 = scmp.ne.s32.totalorder %s147, %s148
    %p157 = scmp.eq.s32.totalorder %s22, 0
    %p158 = por %p156, %p157
    %p159 = scmp.ne.s32.totalorder %s147, %s148
    %p160 = scmp.eq.s32.totalorder %s23, 1
    %p161 = por %p159, %p160
    %p163 = scmp.ne.s32.totalorder %s148, %s162
    %p164 = scmp.eq.s32.totalorder %s23, 0
    %p165 = por %p163, %p164
    %s167 = sadd.s32 %s166, 1
    %p170 = scmp.eq.s32.totalorder %s17, 1
    %p171 = scmp.ne.s32.totalorder %s166, %s168
    %p172 = scmp.eq.s32.totalorder %s17, 0
    %p173 = por %p171, %p172
    %p174 = scmp.ne.s32.totalorder %s166, %s168
    %p175 = scmp.eq.s32.totalorder %s22, 1
    %p176 = por %p174, %p175
    %p177 = scmp.ne.s32.totalorder %s168, %s169
    %p178 = scmp.eq.s32.totalorder %s22, 0
    %p179 = por %p177, %p178
    %p180 = scmp.ne.s32.totalorder %s168, %s169
    %p181 = scmp.eq.s32.totalorder %s23, 1
    %p182 = por %p180, %p181
    %p184 = scmp.ne.s32.totalorder %s169, %s183
    %p185 = scmp.eq.s32.totalorder %s23, 0
    %p186 = por %p184, %p185
    %s188 = sadd.s32 %s187, 1
    %p191 = scmp.eq.s32.totalorder %s17, 1
    %p192 = scmp.ne.s32.totalorder %s187, %s189
    %p193 = scmp.eq.s32.totalorder %s17, 0
    %p194 = por %p192, %p193
    %p195 = scmp.ne.s32.totalorder %s187, %s189
    %p196 = scmp.eq.s32.totalorder %s22, 1
    %p197 = por %p195, %p196
    %p198 = scmp.ne.s32.totalorder %s189, %s190
    %p199 = scmp.eq.s32.totalorder %s22, 0
    %p200 = por %p198, %p199
    %p201 = scmp.ne.s32.totalorder %s189, %s190
    %p202 = scmp.eq.s32.totalorder %s23, 1
    %p203 = por %p201, %p202
    %p205 = scmp.ne.s32.totalorder %s190, %s204
    %p206 = scmp.eq.s32.totalorder %s23, 0
    %p207 = por %p205, %p206
    %s209 = sadd.s32 %s208, 1
    %p212 = scmp.eq.s32.totalorder %s17, 1
    %p213 = scmp.ne.s32.totalorder %s208, %s210
    %p214 = scmp.eq.s32.totalorder %s17, 0
    %p215 = por %p213, %p214
    %p216 = scmp.ne.s32.totalorder %s208, %s210
    %p217 = scmp.eq.s32.totalorder %s22, 1
    %p218 = por %p216, %p217
    %p219 = scmp.ne.s32.totalorder %s210, %s211
    %p220 = scmp.eq.s32.totalorder %s22, 0
    %p221 = por %p219, %p220
    %p222 = scmp.ne.s32.totalorder %s210, %s211
    %p223 = scmp.eq.s32.totalorder %s23, 1
    %p224 = por %p222, %p223
    %p226 = scmp.ne.s32.totalorder %s211, %s225
    %p227 = scmp.eq.s32.totalorder %s23, 0
    %p228 = por %p226, %p227
    %s230 = sadd.s32 %s229, 1
    %p233 = scmp.eq.s32.totalorder %s17, 1
    %p234 = scmp.ne.s32.totalorder %s229, %s231
    %p235 = scmp.eq.s32.totalorder %s17, 0
    %p236 = por %p234, %p235
    %p237 = scmp.ne.s32.totalorder %s229, %s231
    %p238 = scmp.eq.s32.totalorder %s22, 1
    %p239 = por %p237, %p238
    %p240 = scmp.ne.s32.totalorder %s231, %s232
    %p241 = scmp.eq.s32.totalorder %s22, 0
    %p242 = por %p240, %p241
    %p243 = scmp.ne.s32.totalorder %s231, %s232
    %p244 = scmp.eq.s32.totalorder %s23, 1
    %p245 = por %p243, %p244
    %p247 = scmp.ne.s32.totalorder %s232, %s246
    %p248 = scmp.eq.s32.totalorder %s23, 0
    %p249 = por %p247, %p248
    %s251 = sadd.s32 %s250, 1
    %p254 = scmp.eq.s32.totalorder %s17, 1
    %p255 = scmp.ne.s32.totalorder %s250, %s252
    %p256 = scmp.eq.s32.totalorder %s17, 0
    %p257 = por %p255, %p256
    %p258 = scmp.ne.s32.totalorder %s250, %s252
    %p259 = scmp.eq.s32.totalorder %s22, 1
    %p260 = por %p258, %p259
    %p261 = scmp.ne.s32.totalorder %s252, %s253
    %p262 = scmp.eq.s32.totalorder %s22, 0
    %p263 = por %p261, %p262
    %p264 = scmp.ne.s32.totalorder %s252, %s253
    %p265 = scmp.eq.s32.totalorder %s23, 1
    %p266 = por %p264, %p265
    %p268 = scmp.ne.s32.totalorder %s253, %s267
    %p269 = scmp.eq.s32.totalorder %s23, 0
    %p270 = por %p268, %p269
    %p271 = scmp.le.s32.totalorder 1, %s17
    %p272 = scmp.lt.s32.totalorder %s17, 3
    %p273 = pnand %p271, %p272
    %p274 = pneg %p273
    // Predicated region
    $region9: #{combined_readout.1} parent=5 // pred_check
      _
    $region10: #{combined_readout.1} parent=5 // pred_check_branch
      %276 = sbr.rel (%p273) target = $region12
    $region11: #{combined_readout.1} parent=5 // pred_region
      %s277 = ssub.s32 %s17, 1
      // Predicated region
      $region13: #{combined_readout.1} parent=11 // pred_check
        %p278 = pneg %p116
      $region14: #{combined_readout.1} parent=11 // pred_check_branch
        %280 = sbr.rel (%p278) target = $region16
      $region15: #{combined_readout.1} parent=11 // pred_region
        _
      $region16: #{combined_readout.1} parent=11 // pred_fallthru
        _
      // Predicated region
      $region17: #{combined_readout.1} parent=11 // pred_check
        %p281 = pneg %p137
      $region18: #{combined_readout.1} parent=11 // pred_check_branch
        %283 = sbr.rel (%p281) target = $region20
      $region19: #{combined_readout.1} parent=11 // pred_region
        _
      $region20: #{combined_readout.1} parent=11 // pred_fallthru
        _
      // Predicated region
      $region21: #{combined_readout.1} parent=11 // pred_check
        %p284 = pneg %p158
      $region22: #{combined_readout.1} parent=11 // pred_check_branch
        %286 = sbr.rel (%p284) target = $region24
      $region23: #{combined_readout.1} parent=11 // pred_region
        _
      $region24: #{combined_readout.1} parent=11 // pred_fallthru
        _
      // Predicated region
      $region25: #{combined_readout.1} parent=11 // pred_check
        %p287 = pneg %p179
      $region26: #{combined_readout.1} parent=11 // pred_check_branch
        %289 = sbr.rel (%p287) target = $region28
      $region27: #{combined_readout.1} parent=11 // pred_region
        _
      $region28: #{combined_readout.1} parent=11 // pred_fallthru
        _
    $region12: #{combined_readout.1} parent=5 // pred_fallthru
      _
    %p290 = scmp.lt.s32.totalorder %s17, 2
    // Predicated region
    $region29: #{combined_readout.1} parent=5 // pred_check
      %p291 = pneg %p290
    $region30: #{combined_readout.1} parent=5 // pred_check_branch
      %293 = sbr.rel (%p291) target = $region32
    $region31: #{combined_readout.1} parent=5 // pred_region
      // Predicated region
      $region33: #{combined_readout.1} parent=31 // pred_check
        %p294 = pneg %p37
      $region34: #{combined_readout.1} parent=31 // pred_check_branch
        %296 = sbr.rel (%p294) target = $region36
      $region35: #{combined_readout.1} parent=31 // pred_region
        %p297 = scmp.lt.s32.totalorder %s17, 1
        %s298 = scalar_select %p297, %s17, 1
        %s299 = scalar_lea.vmem %s0, %s298
      $region36: #{combined_readout.1} parent=31 // pred_fallthru
        _
      // Predicated region
      $region37: #{combined_readout.1} parent=31 // pred_check
        %p300 = pneg %p63
      $region38: #{combined_readout.1} parent=31 // pred_check_branch
        %302 = sbr.rel (%p300) target = $region40
      $region39: #{combined_readout.1} parent=31 // pred_region
        %s303 = smul.u32 16, %s17
        %p304 = scmp.lt.s32.totalorder %s303, 31
        %s305 = scalar_select %p304, %s303, 31
        %s306 = smul.addr %s305, 8
        %s307 = scalar_lea.vmem %s1, %s306
        %s308 = smul.u32 16, %s17
      $region40: #{combined_readout.1} parent=31 // pred_fallthru
        _
      // Predicated region
      $region41: #{combined_readout.1} parent=31 // pred_check
        %p309 = pneg %p89
      $region42: #{combined_readout.1} parent=31 // pred_check_branch
        %311 = sbr.rel (%p309) target = $region44
      $region43: #{combined_readout.1} parent=31 // pred_region
        %s312 = smul.u32 16, %s17
        %p313 = scmp.lt.s32.totalorder %s312, 31
        %s314 = scalar_select %p313, %s312, 31
        %s315 = smul.addr %s314, 8
        %s316 = scalar_lea.vmem %s2, %s315
        %s317 = smul.u32 16, %s17
      $region44: #{combined_readout.1} parent=31 // pred_fallthru
        _
    $region32: #{combined_readout.1} parent=5 // pred_fallthru
      _
    %p318 = scmp.le.s32.totalorder 1, %s17
    %p319 = scmp.lt.s32.totalorder %s17, 3
    %p320 = pnand %p318, %p319
    %p321 = pneg %p320
    // Predicated region
    $region45: #{combined_readout.1} parent=5 // pred_check
      _
    $region46: #{combined_readout.1} parent=5 // pred_check_branch
      %323 = sbr.rel (%p320) target = $region48
    $region47: #{combined_readout.1} parent=5 // pred_region
      %s324 = ssub.s32 %s17, 1
      %p325 = scmp.lt.s32.totalorder %s22, 1
      %s326 = scalar_select %p325, %s22, 1
      %s327 = scalar_lea.vmem %s0, %s326
      %p328 = pneg %p43
      %p329 = pneg %p40
      %s330 = smul.u32 16, %s22
      %p331 = scmp.lt.s32.totalorder %s330, 31
      %s332 = scalar_select %p331, %s330, 31
      %s333 = smul.addr %s332, 8
      %s334 = scalar_lea.vmem %s1, %s333
      %p335 = pneg %p69
      %p336 = pneg %p66
      %s337 = smul.u32 16, %s22
      %p338 = scmp.lt.s32.totalorder %s337, 31
      %s339 = scalar_select %p338, %s337, 31
      %s340 = smul.addr %s339, 8
      %s341 = scalar_lea.vmem %s2, %s340
      %p342 = pneg %p95
      %p343 = pneg %p92
      %p344 = pneg %p116
      %p345 = pneg %p113
      %p346 = pneg %p137
      %p347 = pneg %p134
      %p348 = pneg %p158
      %p349 = pneg %p155
      %p350 = pneg %p179
      %p351 = pneg %p176
      %p352 = pneg %p200
      %p353 = pneg %p197
      %p354 = pneg %p221
      %p355 = pneg %p218
      %p356 = pneg %p242
      %p357 = pneg %p239
      %p358 = pneg %p263
      %p359 = pneg %p260
      %p360 = scmp.lt.s32.totalorder %s22, 1
      %s361 = scalar_select %p360, %s22, 1
      %s362 = scalar_lea.vmem %s0, %s361
      %s363 = smul.u32 16, %s22
      %p364 = scmp.lt.s32.totalorder %s363, 31
      %s365 = scalar_select %p364, %s363, 31
      %s366 = smul.addr %s365, 8
      %s367 = scalar_lea.vmem %s1, %s366
      %s368 = smul.u32 16, %s22
      %s369 = smul.u32 16, %s22
      %p370 = scmp.lt.s32.totalorder %s369, 31
      %s371 = scalar_select %p370, %s369, 31
      %s372 = smul.addr %s371, 8
      %s373 = scalar_lea.vmem %s2, %s372
      %s374 = smul.u32 16, %s22
      %p375 = scmp.eq.s32.totalorder %s22, 0
      // Predicated region
      $region49: #{combined_readout.1} parent=47 // pred_check
        %p376 = pneg %p375
      $region50: #{combined_readout.1} parent=47 // pred_check_branch
        %378 = sbr.rel (%p376) target = $region52
      $region51: #{combined_readout.1} parent=47 // pred_region
        %379 = vst [vmem:[%s7] sm:$0xff] 0.0
        %380 = vst [vmem:[%s8] sm:$0xff] 0.0
        %381 = vst [vmem:[%s10] sm:$0xff] 0.0
        %382 = vst [vmem:[%s9] sm:$0xff] -inf
        %383 = vst [vmem:[#allocation2] sm:$0xff] 0.0
        %vm384 = vcmask 7168
        %385 = vst.msk [vmem:[#allocation3] sm:$0xff] %vm384, 0.0
      $region52: #{combined_readout.1} parent=47 // pred_fallthru
        _
      %v386 = vld [vmem:[%s373] sm:$0xff]
      %v387 = vld [vmem:[%s373 + $0x8] sm:$0xff]
      %v388 = vld [vmem:[%s373 + $0x10] sm:$0xff]
      %v389 = vld [vmem:[%s373 + $0x18] sm:$0xff]
      %v390 = vld [vmem:[%s373 + $0x20] sm:$0xff]
      %v391 = vld [vmem:[%s373 + $0x28] sm:$0xff]
      %v392 = vld [vmem:[%s373 + $0x30] sm:$0xff]
      %v393 = vld [vmem:[%s373 + $0x38] sm:$0xff]
      %v394 = vld [vmem:[%s373 + $0x40] sm:$0xff]
      %v395 = vld [vmem:[%s373 + $0x48] sm:$0xff]
      %v396 = vld [vmem:[%s373 + $0x50] sm:$0xff]
      %v397 = vld [vmem:[%s373 + $0x58] sm:$0xff]
      %v398 = vld [vmem:[%s373 + $0x60] sm:$0xff]
      %v399 = vld [vmem:[%s373 + $0x68] sm:$0xff]
      %v400 = vld [vmem:[%s373 + $0x70] sm:$0xff]
      %v401 = vld [vmem:[%s373 + $0x78] sm:$0xff]
      %v402 = vld [vmem:[%s362] sm:$0x1]
      %v403 = vld [vmem:[%s367] sm:$0xff]
      %v404 = vld [vmem:[%s367 + $0x8] sm:$0xff]
      %v405 = vld [vmem:[%s367 + $0x10] sm:$0xff]
      %v406 = vld [vmem:[%s367 + $0x18] sm:$0xff]
      %v407 = vld [vmem:[%s367 + $0x20] sm:$0xff]
      %v408 = vld [vmem:[%s367 + $0x28] sm:$0xff]
      %v409 = vld [vmem:[%s367 + $0x30] sm:$0xff]
      %v410 = vld [vmem:[%s367 + $0x38] sm:$0xff]
      %v411 = vld [vmem:[%s367 + $0x40] sm:$0xff]
      %v412 = vld [vmem:[%s367 + $0x48] sm:$0xff]
      %v413 = vld [vmem:[%s367 + $0x50] sm:$0xff]
      %v414 = vld [vmem:[%s367 + $0x58] sm:$0xff]
      %v415 = vld [vmem:[%s367 + $0x60] sm:$0xff]
      %v416 = vld [vmem:[%s367 + $0x68] sm:$0xff]
      %v417 = vld [vmem:[%s367 + $0x70] sm:$0xff]
      %v418 = vld [vmem:[%s367 + $0x78] sm:$0xff]
      %v419 = vlaneseq
      %v420 = vshrl.u32 %v419, 7
      %v421 = vlaneseq
      %v422 = vshrl.u32 %v421, 7
      %v423 = vsub.s32 0, %v422
      %v424 = vrot.slane %v402, %v423
      %vm425 = vcmp.eq.s32.totalorder %v420, %v424
      %v426 = vsel %vm425, 1, 0
      %v427 = vcvt.s32.f32 %v426
      %v428 = vld [vmem:[%s7] sm:$0xff]
      %429 = vmatprep.subr.mxu0 0.0
      %430 = vmatpush1.msra.mxu0 %v386
      %431 = vmatprep.subr.mxu0 0.0
      %432 = vmatpush1.msra.mxu0 %v387
      %433 = vmatprep.subr.mxu0 0.0
      %434 = vmatpush1.msra.mxu0 %v388
      %435 = vmatprep.subr.mxu0 0.0
      %436 = vmatpush1.msra.mxu0 %v389
      %437 = vmatprep.subr.mxu0 0.0
      %438 = vmatpush1.msra.mxu0 %v390
      %439 = vmatprep.subr.mxu0 0.0
      %440 = vmatpush1.msra.mxu0 %v391
      %441 = vmatprep.subr.mxu0 0.0
      %442 = vmatpush1.msra.mxu0 %v392
      %443 = vmatprep.subr.mxu0 0.0
      %444 = vmatpush1.msra.mxu0 %v393
      %445 = vmatprep.subr.mxu0 0.0
      %446 = vmatpush1.msra.mxu0 %v394
      %447 = vmatprep.subr.mxu0 0.0
      %448 = vmatpush1.msra.mxu0 %v395
      %449 = vmatprep.subr.mxu0 0.0
      %450 = vmatpush1.msra.mxu0 %v396
      %451 = vmatprep.subr.mxu0 0.0
      %452 = vmatpush1.msra.mxu0 %v397
      %453 = vmatprep.subr.mxu0 0.0
      %454 = vmatpush1.msra.mxu0 %v398
      %455 = vmatprep.subr.mxu0 0.0
      %456 = vmatpush1.msra.mxu0 %v399
      %457 = vmatprep.subr.mxu0 0.0
      %458 = vmatpush1.msra.mxu0 %v400
      %459 = vmatprep.subr.mxu0 0.0
      %460 = vmatpush1.msra.mxu0 %v401
      %461 = vmatprep.subr.mxu0 0.0
      %462 = vmatpush1.msra.mxu0 0.0
      %463 = vmatprep.subr.mxu0 0.0
      %464 = vmatpush1.msra.mxu0 0.0
      %465 = vmatprep.subr.mxu0 0.0
      %466 = vmatpush1.msra.mxu0 0.0
      %467 = vmatprep.subr.mxu0 0.0
      %468 = vmatpush1.msra.mxu0 0.0
      %469 = vmatprep.subr.mxu0 0.0
      %470 = vmatpush1.msra.mxu0 0.0
      %471 = vmatprep.subr.mxu0 0.0
      %472 = vmatpush1.msra.mxu0 0.0
      %473 = vmatprep.subr.mxu0 0.0
      %474 = vmatpush1.msra.mxu0 0.0
      %475 = vmatprep.subr.mxu0 0.0
      %476 = vmatpush1.msra.mxu0 0.0
      %477 = vmatprep.subr.mxu0 0.0
      %478 = vmatpush1.msra.mxu0 0.0
      %479 = vmatprep.subr.mxu0 0.0
      %480 = vmatpush1.msra.mxu0 0.0
      %481 = vmatprep.subr.mxu0 0.0
      %482 = vmatpush1.msra.mxu0 0.0
      %483 = vmatprep.subr.mxu0 0.0
      %484 = vmatpush1.msra.mxu0 0.0
      %485 = vmatprep.subr.mxu0 0.0
      %486 = vmatpush1.msra.mxu0 0.0
      %487 = vmatprep.subr.mxu0 0.0
      %488 = vmatpush1.msra.mxu0 0.0
      %489 = vmatprep.subr.mxu0 0.0
      %490 = vmatpush1.msra.mxu0 0.0
      %491 = vmatprep.subr.mxu0 0.0
      %492 = vmatpush1.msra.mxu0 0.0
      %493 = vmatprep.mubr.f32.mxu0 0.0
      %494 = vmatmul.mubr.f32.gmra.mrb[0].mxu0 %v427
      %v495 = vpop.f32.mrb[0].mxu0
      %v496 = vadd.f32 0.0, %v495
      %v497 = vpop.f32.mrb[0].mxu0
      %498 = vdwg.mxu0
      %v499 = vadd.f32 %v428, %v496
      %500 = vst [vmem:[%s7] sm:$0xff] %v499
      %v501 = vld [vmem:[#allocation3] sm:$0xff]
      %502 = vadd.xlane.f32.xlu0 %v427
      %v503 = vpop.xlane.xlu0 %502
      %v504 = vadd.f32 %v501, %v503
      %vm505 = vcmask 7168
      %506 = vst.msk [vmem:[#allocation3] sm:$0xff] %vm505, %v504
      %v507 = vld [vmem:[%s3] sm:$0xff]
      %v508 = vld [vmem:[%s3 + $0x8] sm:$0xff]
      %v509 = vld [vmem:[%s3 + $0x10] sm:$0xff]
      %v510 = vld [vmem:[%s3 + $0x18] sm:$0xff]
      %v511 = vld [vmem:[%s3 + $0x20] sm:$0xff]
      %v512 = vld [vmem:[%s3 + $0x28] sm:$0xff]
      %v513 = vld [vmem:[%s3 + $0x30] sm:$0xff]
      %v514 = vld [vmem:[%s3 + $0x38] sm:$0xff]
      %v515 = vld [vmem:[%s3 + $0x40] sm:$0xff]
      %v516 = vld [vmem:[%s3 + $0x48] sm:$0xff]
      %v517 = vld [vmem:[%s3 + $0x50] sm:$0xff]
      %v518 = vld [vmem:[%s3 + $0x58] sm:$0xff]
      %v519 = vld [vmem:[%s3 + $0x60] sm:$0xff]
      %v520 = vld [vmem:[%s3 + $0x68] sm:$0xff]
      %v521 = vld [vmem:[%s3 + $0x70] sm:$0xff]
      %v522 = vld [vmem:[%s3 + $0x78] sm:$0xff]
      %v523 = vld [vmem:[%s4] sm:$0x1]
      %v525 = vlaneseq
      %v526 = vshrl.u32 %v525, 7
      %v527 = vsub.s32 0, %v526
      %v528 = vrot.slane %v523, %v527
      %530 = vmatprep.subr.mxu0 0.0
      %531 = vmatpush1.msra.mxu0 %v507
      %532 = vmatprep.subr.mxu0 0.0
      %533 = vmatpush1.msra.mxu0 %v508
      %534 = vmatprep.subr.mxu0 0.0
      %535 = vmatpush1.msra.mxu0 %v509
      %536 = vmatprep.subr.mxu0 0.0
      %537 = vmatpush1.msra.mxu0 %v510
      %538 = vmatprep.subr.mxu0 0.0
      %539 = vmatpush1.msra.mxu0 %v511
      %540 = vmatprep.subr.mxu0 0.0
      %541 = vmatpush1.msra.mxu0 %v512
      %542 = vmatprep.subr.mxu0 0.0
      %543 = vmatpush1.msra.mxu0 %v513
      %544 = vmatprep.subr.mxu0 0.0
      %545 = vmatpush1.msra.mxu0 %v514
      %546 = vmatprep.subr.mxu0 0.0
      %547 = vmatpush1.msra.mxu0 %v515
      %548 = vmatprep.subr.mxu0 0.0
      %549 = vmatpush1.msra.mxu0 %v516
      %550 = vmatprep.subr.mxu0 0.0
      %551 = vmatpush1.msra.mxu0 %v517
      %552 = vmatprep.subr.mxu0 0.0
      %553 = vmatpush1.msra.mxu0 %v518
      %554 = vmatprep.subr.mxu0 0.0
      %555 = vmatpush1.msra.mxu0 %v519
      %556 = vmatprep.subr.mxu0 0.0
      %557 = vmatpush1.msra.mxu0 %v520
      %558 = vmatprep.subr.mxu0 0.0
      %559 = vmatpush1.msra.mxu0 %v521
      %560 = vmatprep.subr.mxu0 0.0
      %561 = vmatpush1.msra.mxu0 %v522
      %562 = vmatprep.subr.mxu0 0.0
      %563 = vmatpush1.msra.mxu0 0.0
      %564 = vmatprep.subr.mxu0 0.0
      %565 = vmatpush1.msra.mxu0 0.0
      %566 = vmatprep.subr.mxu0 0.0
      %567 = vmatpush1.msra.mxu0 0.0
      %568 = vmatprep.subr.mxu0 0.0
      %569 = vmatpush1.msra.mxu0 0.0
      %570 = vmatprep.subr.mxu0 0.0
      %571 = vmatpush1.msra.mxu0 0.0
      %572 = vmatprep.subr.mxu0 0.0
      %573 = vmatpush1.msra.mxu0 0.0
      %574 = vmatprep.subr.mxu0 0.0
      %575 = vmatpush1.msra.mxu0 0.0
      %576 = vmatprep.subr.mxu0 0.0
      %577 = vmatpush1.msra.mxu0 0.0
      %578 = vmatprep.subr.mxu0 0.0
      %579 = vmatpush1.msra.mxu0 0.0
      %580 = vmatprep.subr.mxu0 0.0
      %581 = vmatpush1.msra.mxu0 0.0
      %582 = vmatprep.subr.mxu0 0.0
      %583 = vmatpush1.msra.mxu0 0.0
      %584 = vmatprep.subr.mxu0 0.0
      %585 = vmatpush1.msra.mxu0 0.0
      %586 = vmatprep.subr.mxu0 0.0
      %587 = vmatpush1.msra.mxu0 0.0
      %588 = vmatprep.subr.mxu0 0.0
      %589 = vmatpush1.msra.mxu0 0.0
      %590 = vmatprep.subr.mxu0 0.0
      %591 = vmatpush1.msra.mxu0 0.0
      %592 = vmatprep.subr.mxu0 0.0
      %593 = vmatpush1.msra.mxu0 0.0
      %594 = vmatprep.mubr.f32.mxu0 0.0
      %595 = vmatmul.mubr.f32.gmra.mrb[0].mxu0 %v386
      %v596 = vpop.f32.mrb[0].mxu0
      %v597 = vadd.f32 %v528, %v596
      %v598 = vpop.f32.mrb[0].mxu0
      %599 = vmatprep.mubr.f32.mxu0 0.0
      %600 = vmatmul.mubr.f32.gmra.mrb[0].mxu0 %v387
      %v601 = vpop.f32.mrb[0].mxu0
      %v602 = vadd.f32 %v528, %v601
      %v603 = vpop.f32.mrb[0].mxu0
      %604 = vmatprep.mubr.f32.mxu0 0.0
      %605 = vmatmul.mubr.f32.gmra.mrb[0].mxu0 %v388
      %v606 = vpop.f32.mrb[0].mxu0
      %v607 = vadd.f32 %v528, %v606
      %v608 = vpop.f32.mrb[0].mxu0
      %609 = vmatprep.mubr.f32.mxu0 0.0
      %610 = vmatmul.mubr.f32.gmra.mrb[0].mxu0 %v389
      %v611 = vpop.f32.mrb[0].mxu0
      %v612 = vadd.f32 %v528, %v611
      %v613 = vpop.f32.mrb[0].mxu0
      %614 = vmatprep.mubr.f32.mxu0 0.0
      %615 = vmatmul.mubr.f32.gmra.mrb[0].mxu0 %v390
      %v616 = vpop.f32.mrb[0].mxu0
      %v617 = vadd.f32 %v528, %v616
      %v618 = vpop.f32.mrb[0].mxu0
      %619 = vmatprep.mubr.f32.mxu0 0.0
      %620 = vmatmul.mubr.f32.gmra.mrb[0].mxu0 %v391
      %v621 = vpop.f32.mrb[0].mxu0
      %v622 = vadd.f32 %v528, %v621
      %v623 = vpop.f32.mrb[0].mxu0
      %624 = vmatprep.mubr.f32.mxu0 0.0
      %625 = vmatmul.mubr.f32.gmra.mrb[0].mxu0 %v392
      %v626 = vpop.f32.mrb[0].mxu0
      %v627 = vadd.f32 %v528, %v626
      %v628 = vpop.f32.mrb[0].mxu0
      %629 = vmatprep.mubr.f32.mxu0 0.0
      %630 = vmatmul.mubr.f32.gmra.mrb[0].mxu0 %v393
      %v631 = vpop.f32.mrb[0].mxu0
      %v632 = vadd.f32 %v528, %v631
      %v633 = vpop.f32.mrb[0].mxu0
      %634 = vmatprep.mubr.f32.mxu0 0.0
      %635 = vmatmul.mubr.f32.gmra.mrb[0].mxu0 %v394
      %v636 = vpop.f32.mrb[0].mxu0
      %v637 = vadd.f32 %v528, %v636
      %v638 = vpop.f32.mrb[0].mxu0
      %639 = vmatprep.mubr.f32.mxu0 0.0
      %640 = vmatmul.mubr.f32.gmra.mrb[0].mxu0 %v395
      %v641 = vpop.f32.mrb[0].mxu0
      %v642 = vadd.f32 %v528, %v641
      %v643 = vpop.f32.mrb[0].mxu0
      %644 = vmatprep.mubr.f32.mxu0 0.0
      %645 = vmatmul.mubr.f32.gmra.mrb[0].mxu0 %v396
      %v646 = vpop.f32.mrb[0].mxu0
      %v647 = vadd.f32 %v528, %v646
      %v648 = vpop.f32.mrb[0].mxu0
      %649 = vmatprep.mubr.f32.mxu0 0.0
      %650 = vmatmul.mubr.f32.gmra.mrb[0].mxu0 %v397
      %v651 = vpop.f32.mrb[0].mxu0
      %v652 = vadd.f32 %v528, %v651
      %v653 = vpop.f32.mrb[0].mxu0
      %654 = vmatprep.mubr.f32.mxu0 0.0
      %655 = vmatmul.mubr.f32.gmra.mrb[0].mxu0 %v398
      %v656 = vpop.f32.mrb[0].mxu0
      %v657 = vadd.f32 %v528, %v656
      %v658 = vpop.f32.mrb[0].mxu0
      %659 = vmatprep.mubr.f32.mxu0 0.0
      %660 = vmatmul.mubr.f32.gmra.mrb[0].mxu0 %v399
      %v661 = vpop.f32.mrb[0].mxu0
      %v662 = vadd.f32 %v528, %v661
      %v663 = vpop.f32.mrb[0].mxu0
      %664 = vmatprep.mubr.f32.mxu0 0.0
      %665 = vmatmul.mubr.f32.gmra.mrb[0].mxu0 %v400
      %v666 = vpop.f32.mrb[0].mxu0
      %v667 = vadd.f32 %v528, %v666
      %v668 = vpop.f32.mrb[0].mxu0
      %669 = vmatprep.mubr.f32.mxu0 0.0
      %670 = vmatmul.mubr.f32.gmra.mrb[0].mxu0 %v401
      %v671 = vpop.f32.mrb[0].mxu0
      %v672 = vadd.f32 %v528, %v671
      %v673 = vpop.f32.mrb[0].mxu0
      %674 = vdwg.mxu0
      %v675 = vmax.f32 %v597, 0.0
      %v676 = vmax.f32 %v602, 0.0
      %v677 = vmax.f32 %v607, 0.0
      %v678 = vmax.f32 %v612, 0.0
      %v679 = vmax.f32 %v617, 0.0
      %v680 = vmax.f32 %v622, 0.0
      %v681 = vmax.f32 %v627, 0.0
      %v682 = vmax.f32 %v632, 0.0
      %v683 = vmax.f32 %v637, 0.0
      %v684 = vmax.f32 %v642, 0.0
      %v685 = vmax.f32 %v647, 0.0
      %v686 = vmax.f32 %v652, 0.0
      %v687 = vmax.f32 %v657, 0.0
      %v688 = vmax.f32 %v662, 0.0
      %v689 = vmax.f32 %v667, 0.0
      %v690 = vmax.f32 %v672, 0.0
      %v691 = vld [vmem:[#allocation2] sm:$0xff]
      %692 = vmatprep.subr.mxu0 0.0
      %693 = vmatpush1.msra.mxu0 %v675
      %694 = vmatprep.subr.mxu0 0.0
      %695 = vmatpush1.msra.mxu0 %v676
      %696 = vmatprep.subr.mxu0 0.0
      %697 = vmatpush1.msra.mxu0 %v677
      %698 = vmatprep.subr.mxu0 0.0
      %699 = vmatpush1.msra.mxu0 %v678
      %700 = vmatprep.subr.mxu0 0.0
      %701 = vmatpush1.msra.mxu0 %v679
      %702 = vmatprep.subr.mxu0 0.0
      %703 = vmatpush1.msra.mxu0 %v680
      %704 = vmatprep.subr.mxu0 0.0
      %705 = vmatpush1.msra.mxu0 %v681
      %706 = vmatprep.subr.mxu0 0.0
      %707 = vmatpush1.msra.mxu0 %v682
      %708 = vmatprep.subr.mxu0 0.0
      %709 = vmatpush1.msra.mxu0 %v683
      %710 = vmatprep.subr.mxu0 0.0
      %711 = vmatpush1.msra.mxu0 %v684
      %712 = vmatprep.subr.mxu0 0.0
      %713 = vmatpush1.msra.mxu0 %v685
      %714 = vmatprep.subr.mxu0 0.0
      %715 = vmatpush1.msra.mxu0 %v686
      %716 = vmatprep.subr.mxu0 0.0
      %717 = vmatpush1.msra.mxu0 %v687
      %718 = vmatprep.subr.mxu0 0.0
      %719 = vmatpush1.msra.mxu0 %v688
      %720 = vmatprep.subr.mxu0 0.0
      %721 = vmatpush1.msra.mxu0 %v689
      %722 = vmatprep.subr.mxu0 0.0
      %723 = vmatpush1.msra.mxu0 %v690
      %724 = vmatprep.subr.mxu0 0.0
      %725 = vmatpush1.msra.mxu0 0.0
      %726 = vmatprep.subr.mxu0 0.0
      %727 = vmatpush1.msra.mxu0 0.0
      %728 = vmatprep.subr.mxu0 0.0
      %729 = vmatpush1.msra.mxu0 0.0
      %730 = vmatprep.subr.mxu0 0.0
      %731 = vmatpush1.msra.mxu0 0.0
      %732 = vmatprep.subr.mxu0 0.0
      %733 = vmatpush1.msra.mxu0 0.0
      %734 = vmatprep.subr.mxu0 0.0
      %735 = vmatpush1.msra.mxu0 0.0
      %736 = vmatprep.subr.mxu0 0.0
      %737 = vmatpush1.msra.mxu0 0.0
      %738 = vmatprep.subr.mxu0 0.0
      %739 = vmatpush1.msra.mxu0 0.0
      %740 = vmatprep.subr.mxu0 0.0
      %741 = vmatpush1.msra.mxu0 0.0
      %742 = vmatprep.subr.mxu0 0.0
      %743 = vmatpush1.msra.mxu0 0.0
      %744 = vmatprep.subr.mxu0 0.0
      %745 = vmatpush1.msra.mxu0 0.0
      %746 = vmatprep.subr.mxu0 0.0
      %747 = vmatpush1.msra.mxu0 0.0
      %748 = vmatprep.subr.mxu0 0.0
      %749 = vmatpush1.msra.mxu0 0.0
      %750 = vmatprep.subr.mxu0 0.0
      %751 = vmatpush1.msra.mxu0 0.0
      %752 = vmatprep.subr.mxu0 0.0
      %753 = vmatpush1.msra.mxu0 0.0
      %754 = vmatprep.subr.mxu0 0.0
      %755 = vmatpush1.msra.mxu0 0.0
      %756 = vmatprep.mubr.f32.mxu0 0.0
      %757 = vmatmul.mubr.f32.gmra.mrb[0].mxu0 %v427
      %v758 = vpop.f32.mrb[0].mxu0
      %v759 = vadd.f32 0.0, %v758
      %v760 = vpop.f32.mrb[0].mxu0
      %761 = vdwg.mxu0
      %v762 = vadd.f32 %v691, %v759
      %763 = vst [vmem:[#allocation2] sm:$0xff] %v762
      %vm764 = vcmp.eq.s32.totalorder %v403, 0
      %vm765 = vcmp.eq.s32.totalorder %v404, 0
      %vm766 = vcmp.eq.s32.totalorder %v405, 0
      %vm767 = vcmp.eq.s32.totalorder %v406, 0
      %vm768 = vcmp.eq.s32.totalorder %v407, 0
      %vm769 = vcmp.eq.s32.totalorder %v408, 0
      %vm770 = vcmp.eq.s32.totalorder %v409, 0
      %vm771 = vcmp.eq.s32.totalorder %v410, 0
      %vm772 = vcmp.eq.s32.totalorder %v411, 0
      %vm773 = vcmp.eq.s32.totalorder %v412, 0
      %vm774 = vcmp.eq.s32.totalorder %v413, 0
      %vm775 = vcmp.eq.s32.totalorder %v414, 0
      %vm776 = vcmp.eq.s32.totalorder %v415, 0
      %vm777 = vcmp.eq.s32.totalorder %v416, 0
      %vm778 = vcmp.eq.s32.totalorder %v417, 0
      %vm779 = vcmp.eq.s32.totalorder %v418, 0
      %v780 = vsel %vm764, 1, 0
      %v781 = vsel %vm765, 1, 0
      %v782 = vsel %vm766, 1, 0
      %v783 = vsel %vm767, 1, 0
      %v784 = vsel %vm768, 1, 0
      %v785 = vsel %vm769, 1, 0
      %v786 = vsel %vm770, 1, 0
      %v787 = vsel %vm771, 1, 0
      %v788 = vsel %vm772, 1, 0
      %v789 = vsel %vm773, 1, 0
      %v790 = vsel %vm774, 1, 0
      %v791 = vsel %vm775, 1, 0
      %v792 = vsel %vm776, 1, 0
      %v793 = vsel %vm777, 1, 0
      %v794 = vsel %vm778, 1, 0
      %v795 = vsel %vm779, 1, 0
      %796 = vset.pattern.permute.xlu0 0
      %797 = vperm.xlu0 %796, %v780
      %v798 = vpop.permute.xlu0 %797
      %799 = vset.pattern.permute.xlu0 0
      %800 = vperm.xlu0 %799, %v781
      %v801 = vpop.permute.xlu0 %800
      %802 = vset.pattern.permute.xlu0 0
      %803 = vperm.xlu0 %802, %v782
      %v804 = vpop.permute.xlu0 %803
      %805 = vset.pattern.permute.xlu0 0
      %806 = vperm.xlu0 %805, %v783
      %v807 = vpop.permute.xlu0 %806
      %808 = vset.pattern.permute.xlu0 0
      %809 = vperm.xlu0 %808, %v784
      %v810 = vpop.permute.xlu0 %809
      %811 = vset.pattern.permute.xlu0 0
      %812 = vperm.xlu0 %811, %v785
      %v813 = vpop.permute.xlu0 %812
      %814 = vset.pattern.permute.xlu0 0
      %815 = vperm.xlu0 %814, %v786
      %v816 = vpop.permute.xlu0 %815
      %817 = vset.pattern.permute.xlu0 0
      %818 = vperm.xlu0 %817, %v787
      %v819 = vpop.permute.xlu0 %818
      %820 = vset.pattern.permute.xlu0 0
      %821 = vperm.xlu0 %820, %v788
      %v822 = vpop.permute.xlu0 %821
      %823 = vset.pattern.permute.xlu0 0
      %824 = vperm.xlu0 %823, %v789
      %v825 = vpop.permute.xlu0 %824
      %826 = vset.pattern.permute.xlu0 0
      %827 = vperm.xlu0 %826, %v790
      %v828 = vpop.permute.xlu0 %827
      %829 = vset.pattern.permute.xlu0 0
      %830 = vperm.xlu0 %829, %v791
      %v831 = vpop.permute.xlu0 %830
      %832 = vset.pattern.permute.xlu0 0
      %833 = vperm.xlu0 %832, %v792
      %v834 = vpop.permute.xlu0 %833
      %835 = vset.pattern.permute.xlu0 0
      %836 = vperm.xlu0 %835, %v793
      %v837 = vpop.permute.xlu0 %836
      %838 = vset.pattern.permute.xlu0 0
      %839 = vperm.xlu0 %838, %v794
      %v840 = vpop.permute.xlu0 %839
      %841 = vset.pattern.permute.xlu0 0
      %842 = vperm.xlu0 %841, %v795
      %v843 = vpop.permute.xlu0 %842
      %vm844 = vcmp.eq.s32.totalorder %v798, 1
      %vm845 = vcmp.eq.s32.totalorder %v801, 1
      %vm846 = vcmp.eq.s32.totalorder %v804, 1
      %vm847 = vcmp.eq.s32.totalorder %v807, 1
      %vm848 = vcmp.eq.s32.totalorder %v810, 1
      %vm849 = vcmp.eq.s32.totalorder %v813, 1
      %vm850 = vcmp.eq.s32.totalorder %v816, 1
      %vm851 = vcmp.eq.s32.totalorder %v819, 1
      %vm852 = vcmp.eq.s32.totalorder %v822, 1
      %vm853 = vcmp.eq.s32.totalorder %v825, 1
      %vm854 = vcmp.eq.s32.totalorder %v828, 1
      %vm855 = vcmp.eq.s32.totalorder %v831, 1
      %vm856 = vcmp.eq.s32.totalorder %v834, 1
      %vm857 = vcmp.eq.s32.totalorder %v837, 1
      %vm858 = vcmp.eq.s32.totalorder %v840, 1
      %vm859 = vcmp.eq.s32.totalorder %v843, 1
      %v860 = vsel %vm844, %v386, -inf
      %v861 = vsel %vm845, %v387, -inf
      %v862 = vsel %vm846, %v388, -inf
      %v863 = vsel %vm847, %v389, -inf
      %v864 = vsel %vm848, %v390, -inf
      %v865 = vsel %vm849, %v391, -inf
      %v866 = vsel %vm850, %v392, -inf
      %v867 = vsel %vm851, %v393, -inf
      %v868 = vsel %vm852, %v394, -inf
      %v869 = vsel %vm853, %v395, -inf
      %v870 = vsel %vm854, %v396, -inf
      %v871 = vsel %vm855, %v397, -inf
      %v872 = vsel %vm856, %v398, -inf
      %v873 = vsel %vm857, %v399, -inf
      %v874 = vsel %vm858, %v400, -inf
      %v875 = vsel %vm859, %v401, -inf
      %v876 = vmax.f32 %v860, %v864
      %v877 = vmax.f32 %v861, %v865
      %v878 = vmax.f32 %v862, %v866
      %v879 = vmax.f32 %v863, %v867
      %v880 = vmax.f32 %v876, %v868
      %v881 = vmax.f32 %v877, %v869
      %v882 = vmax.f32 %v878, %v870
      %v883 = vmax.f32 %v879, %v871
      %v884 = vmax.f32 %v880, %v872
      %v885 = vmax.f32 %v881, %v873
      %v886 = vmax.f32 %v882, %v874
      %v887 = vmax.f32 %v883, %v875
      %v888 = vmax.f32 %v884, %v885
      %v889 = vmax.f32 %v886, %v887
      %v890 = vmax.f32 %v888, %v889
      %v891 = vrot.slane %v890, 4
      %v892 = vmax.f32 %v890, %v891
      %v893 = vrot.slane %v892, 2
      %v894 = vmax.f32 %v892, %v893
      %v895 = vrot.slane %v894, 1
      %v896 = vmax.f32 %v894, %v895
      %vm897 = vcmp.eq.s32.totalorder %v403, 1
      %vm898 = vcmp.eq.s32.totalorder %v404, 1
      %vm899 = vcmp.eq.s32.totalorder %v405, 1
      %vm900 = vcmp.eq.s32.totalorder %v406, 1
      %vm901 = vcmp.eq.s32.totalorder %v407, 1
      %vm902 = vcmp.eq.s32.totalorder %v408, 1
      %vm903 = vcmp.eq.s32.totalorder %v409, 1
      %vm904 = vcmp.eq.s32.totalorder %v410, 1
      %vm905 = vcmp.eq.s32.totalorder %v411, 1
      %vm906 = vcmp.eq.s32.totalorder %v412, 1
      %vm907 = vcmp.eq.s32.totalorder %v413, 1
      %vm908 = vcmp.eq.s32.totalorder %v414, 1
      %vm909 = vcmp.eq.s32.totalorder %v415, 1
      %vm910 = vcmp.eq.s32.totalorder %v416, 1
      %vm911 = vcmp.eq.s32.totalorder %v417, 1
      %vm912 = vcmp.eq.s32.totalorder %v418, 1
      %v913 = vsel %vm897, 1, 0
      %v914 = vsel %vm898, 1, 0
      %v915 = vsel %vm899, 1, 0
      %v916 = vsel %vm900, 1, 0
      %v917 = vsel %vm901, 1, 0
      %v918 = vsel %vm902, 1, 0
      %v919 = vsel %vm903, 1, 0
      %v920 = vsel %vm904, 1, 0
      %v921 = vsel %vm905, 1, 0
      %v922 = vsel %vm906, 1, 0
      %v923 = vsel %vm907, 1, 0
      %v924 = vsel %vm908, 1, 0
      %v925 = vsel %vm909, 1, 0
      %v926 = vsel %vm910, 1, 0
      %v927 = vsel %vm911, 1, 0
      %v928 = vsel %vm912, 1, 0
      %929 = vset.pattern.permute.xlu0 0
      %930 = vperm.xlu0 %929, %v913
      %v931 = vpop.permute.xlu0 %930
      %932 = vset.pattern.permute.xlu0 0
      %933 = vperm.xlu0 %932, %v914
      %v934 = vpop.permute.xlu0 %933
      %935 = vset.pattern.permute.xlu0 0
      %936 = vperm.xlu0 %935, %v915
      %v937 = vpop.permute.xlu0 %936
      %938 = vset.pattern.permute.xlu0 0
      %939 = vperm.xlu0 %938, %v916
      %v940 = vpop.permute.xlu0 %939
      %941 = vset.pattern.permute.xlu0 0
      %942 = vperm.xlu0 %941, %v917
      %v943 = vpop.permute.xlu0 %942
      %944 = vset.pattern.permute.xlu0 0
      %945 = vperm.xlu0 %944, %v918
      %v946 = vpop.permute.xlu0 %945
      %947 = vset.pattern.permute.xlu0 0
      %948 = vperm.xlu0 %947, %v919
      %v949 = vpop.permute.xlu0 %948
      %950 = vset.pattern.permute.xlu0 0
      %951 = vperm.xlu0 %950, %v920
      %v952 = vpop.permute.xlu0 %951
      %953 = vset.pattern.permute.xlu0 0
      %954 = vperm.xlu0 %953, %v921
      %v955 = vpop.permute.xlu0 %954
      %956 = vset.pattern.permute.xlu0 0
      %957 = vperm.xlu0 %956, %v922
      %v958 = vpop.permute.xlu0 %957
      %959 = vset.pattern.permute.xlu0 0
      %960 = vperm.xlu0 %959, %v923
      %v961 = vpop.permute.xlu0 %960
      %962 = vset.pattern.permute.xlu0 0
      %963 = vperm.xlu0 %962, %v924
      %v964 = vpop.permute.xlu0 %963
      %965 = vset.pattern.permute.xlu0 0
      %966 = vperm.xlu0 %965, %v925
      %v967 = vpop.permute.xlu0 %966
      %968 = vset.pattern.permute.xlu0 0
      %969 = vperm.xlu0 %968, %v926
      %v970 = vpop.permute.xlu0 %969
      %971 = vset.pattern.permute.xlu0 0
      %972 = vperm.xlu0 %971, %v927
      %v973 = vpop.permute.xlu0 %972
      %974 = vset.pattern.permute.xlu0 0
      %975 = vperm.xlu0 %974, %v928
      %v976 = vpop.permute.xlu0 %975
      %vm977 = vcmp.eq.s32.totalorder %v931, 1
      %vm978 = vcmp.eq.s32.totalorder %v934, 1
      %vm979 = vcmp.eq.s32.totalorder %v937, 1
      %vm980 = vcmp.eq.s32.totalorder %v940, 1
      %vm981 = vcmp.eq.s32.totalorder %v943, 1
      %vm982 = vcmp.eq.s32.totalorder %v946, 1
      %vm983 = vcmp.eq.s32.totalorder %v949, 1
      %vm984 = vcmp.eq.s32.totalorder %v952, 1
      %vm985 = vcmp.eq.s32.totalorder %v955, 1
      %vm986 = vcmp.eq.s32.totalorder %v958, 1
      %vm987 = vcmp.eq.s32.totalorder %v961, 1
      %vm988 = vcmp.eq.s32.totalorder %v964, 1
      %vm989 = vcmp.eq.s32.totalorder %v967, 1
      %vm990 = vcmp.eq.s32.totalorder %v970, 1
      %vm991 = vcmp.eq.s32.totalorder %v973, 1
      %vm992 = vcmp.eq.s32.totalorder %v976, 1
      %v993 = vsel %vm977, %v386, -inf
      %v994 = vsel %vm978, %v387, -inf
      %v995 = vsel %vm979, %v388, -inf
      %v996 = vsel %vm980, %v389, -inf
      %v997 = vsel %vm981, %v390, -inf
      %v998 = vsel %vm982, %v391, -inf
      %v999 = vsel %vm983, %v392, -inf
      %v1000 = vsel %vm984, %v393, -inf
      %v1001 = vsel %vm985, %v394, -inf
      %v1002 = vsel %vm986, %v395, -inf
      %v1003 = vsel %vm987, %v396, -inf
      %v1004 = vsel %vm988, %v397, -inf
      %v1005 = vsel %vm989, %v398, -inf
      %v1006 = vsel %vm990, %v399, -inf
      %v1007 = vsel %vm991, %v400, -inf
      %v1008 = vsel %vm992, %v401, -inf
      %v1009 = vmax.f32 %v993, %v997
      %v1010 = vmax.f32 %v994, %v998
      %v1011 = vmax.f32 %v995, %v999
      %v1012 = vmax.f32 %v996, %v1000
      %v1013 = vmax.f32 %v1009, %v1001
      %v1014 = vmax.f32 %v1010, %v1002
      %v1015 = vmax.f32 %v1011, %v1003
      %v1016 = vmax.f32 %v1012, %v1004
      %v1017 = vmax.f32 %v1013, %v1005
      %v1018 = vmax.f32 %v1014, %v1006
      %v1019 = vmax.f32 %v1015, %v1007
      %v1020 = vmax.f32 %v1016, %v1008
      %v1021 = vmax.f32 %v1017, %v1018
      %v1022 = vmax.f32 %v1019, %v1020
      %v1023 = vmax.f32 %v1021, %v1022
      %v1024 = vrot.slane %v1023, 4
      %v1025 = vmax.f32 %v1023, %v1024
      %v1026 = vrot.slane %v1025, 2
      %v1027 = vmax.f32 %v1025, %v1026
      %v1028 = vrot.slane %v1027, 1
      %v1029 = vmax.f32 %v1027, %v1028
      %vm1030 = vcmp.eq.s32.totalorder %v403, 2
      %vm1031 = vcmp.eq.s32.totalorder %v404, 2
      %vm1032 = vcmp.eq.s32.totalorder %v405, 2
      %vm1033 = vcmp.eq.s32.totalorder %v406, 2
      %vm1034 = vcmp.eq.s32.totalorder %v407, 2
      %vm1035 = vcmp.eq.s32.totalorder %v408, 2
      %vm1036 = vcmp.eq.s32.totalorder %v409, 2
      %vm1037 = vcmp.eq.s32.totalorder %v410, 2
      %vm1038 = vcmp.eq.s32.totalorder %v411, 2
      %vm1039 = vcmp.eq.s32.totalorder %v412, 2
      %vm1040 = vcmp.eq.s32.totalorder %v413, 2
      %vm1041 = vcmp.eq.s32.totalorder %v414, 2
      %vm1042 = vcmp.eq.s32.totalorder %v415, 2
      %vm1043 = vcmp.eq.s32.totalorder %v416, 2
      %vm1044 = vcmp.eq.s32.totalorder %v417, 2
      %vm1045 = vcmp.eq.s32.totalorder %v418, 2
      %v1046 = vsel %vm1030, 1, 0
      %v1047 = vsel %vm1031, 1, 0
      %v1048 = vsel %vm1032, 1, 0
      %v1049 = vsel %vm1033, 1, 0
      %v1050 = vsel %vm1034, 1, 0
      %v1051 = vsel %vm1035, 1, 0
      %v1052 = vsel %vm1036, 1, 0
      %v1053 = vsel %vm1037, 1, 0
      %v1054 = vsel %vm1038, 1, 0
      %v1055 = vsel %vm1039, 1, 0
      %v1056 = vsel %vm1040, 1, 0
      %v1057 = vsel %vm1041, 1, 0
      %v1058 = vsel %vm1042, 1, 0
      %v1059 = vsel %vm1043, 1, 0
      %v1060 = vsel %vm1044, 1, 0
      %v1061 = vsel %vm1045, 1, 0
      %1062 = vset.pattern.permute.xlu0 0
      %1063 = vperm.xlu0 %1062, %v1046
      %v1064 = vpop.permute.xlu0 %1063
      %1065 = vset.pattern.permute.xlu0 0
      %1066 = vperm.xlu0 %1065, %v1047
      %v1067 = vpop.permute.xlu0 %1066
      %1068 = vset.pattern.permute.xlu0 0
      %1069 = vperm.xlu0 %1068, %v1048
      %v1070 = vpop.permute.xlu0 %1069
      %1071 = vset.pattern.permute.xlu0 0
      %1072 = vperm.xlu0 %1071, %v1049
      %v1073 = vpop.permute.xlu0 %1072
      %1074 = vset.pattern.permute.xlu0 0
      %1075 = vperm.xlu0 %1074, %v1050
      %v1076 = vpop.permute.xlu0 %1075
      %1077 = vset.pattern.permute.xlu0 0
      %1078 = vperm.xlu0 %1077, %v1051
      %v1079 = vpop.permute.xlu0 %1078
      %1080 = vset.pattern.permute.xlu0 0
      %1081 = vperm.xlu0 %1080, %v1052
      %v1082 = vpop.permute.xlu0 %1081
      %1083 = vset.pattern.permute.xlu0 0
      %1084 = vperm.xlu0 %1083, %v1053
      %v1085 = vpop.permute.xlu0 %1084
      %1086 = vset.pattern.permute.xlu0 0
      %1087 = vperm.xlu0 %1086, %v1054
      %v1088 = vpop.permute.xlu0 %1087
      %1089 = vset.pattern.permute.xlu0 0
      %1090 = vperm.xlu0 %1089, %v1055
      %v1091 = vpop.permute.xlu0 %1090
      %1092 = vset.pattern.permute.xlu0 0
      %1093 = vperm.xlu0 %1092, %v1056
      %v1094 = vpop.permute.xlu0 %1093
      %1095 = vset.pattern.permute.xlu0 0
      %1096 = vperm.xlu0 %1095, %v1057
      %v1097 = vpop.permute.xlu0 %1096
      %1098 = vset.pattern.permute.xlu0 0
      %1099 = vperm.xlu0 %1098, %v1058
      %v1100 = vpop.permute.xlu0 %1099
      %1101 = vset.pattern.permute.xlu0 0
      %1102 = vperm.xlu0 %1101, %v1059
      %v1103 = vpop.permute.xlu0 %1102
      %1104 = vset.pattern.permute.xlu0 0
      %1105 = vperm.xlu0 %1104, %v1060
      %v1106 = vpop.permute.xlu0 %1105
      %1107 = vset.pattern.permute.xlu0 0
      %1108 = vperm.xlu0 %1107, %v1061
      %v1109 = vpop.permute.xlu0 %1108
      %vm1110 = vcmp.eq.s32.totalorder %v1064, 1
      %vm1111 = vcmp.eq.s32.totalorder %v1067, 1
      %vm1112 = vcmp.eq.s32.totalorder %v1070, 1
      %vm1113 = vcmp.eq.s32.totalorder %v1073, 1
      %vm1114 = vcmp.eq.s32.totalorder %v1076, 1
      %vm1115 = vcmp.eq.s32.totalorder %v1079, 1
      %vm1116 = vcmp.eq.s32.totalorder %v1082, 1
      %vm1117 = vcmp.eq.s32.totalorder %v1085, 1
      %vm1118 = vcmp.eq.s32.totalorder %v1088, 1
      %vm1119 = vcmp.eq.s32.totalorder %v1091, 1
      %vm1120 = vcmp.eq.s32.totalorder %v1094, 1
      %vm1121 = vcmp.eq.s32.totalorder %v1097, 1
      %vm1122 = vcmp.eq.s32.totalorder %v1100, 1
      %vm1123 = vcmp.eq.s32.totalorder %v1103, 1
      %vm1124 = vcmp.eq.s32.totalorder %v1106, 1
      %vm1125 = vcmp.eq.s32.totalorder %v1109, 1
      %v1126 = vsel %vm1110, %v386, -inf
      %v1127 = vsel %vm1111, %v387, -inf
      %v1128 = vsel %vm1112, %v388, -inf
      %v1129 = vsel %vm1113, %v389, -inf
      %v1130 = vsel %vm1114, %v390, -inf
      %v1131 = vsel %vm1115, %v391, -inf
      %v1132 = vsel %vm1116, %v392, -inf
      %v1133 = vsel %vm1117, %v393, -inf
      %v1134 = vsel %vm1118, %v394, -inf
      %v1135 = vsel %vm1119, %v395, -inf
      %v1136 = vsel %vm1120, %v396, -inf
      %v1137 = vsel %vm1121, %v397, -inf
      %v1138 = vsel %vm1122, %v398, -inf
      %v1139 = vsel %vm1123, %v399, -inf
      %v1140 = vsel %vm1124, %v400, -inf
      %v1141 = vsel %vm1125, %v401, -inf
      %v1142 = vmax.f32 %v1126, %v1130
      %v1143 = vmax.f32 %v1127, %v1131
      %v1144 = vmax.f32 %v1128, %v1132
      %v1145 = vmax.f32 %v1129, %v1133
      %v1146 = vmax.f32 %v1142, %v1134
      %v1147 = vmax.f32 %v1143, %v1135
      %v1148 = vmax.f32 %v1144, %v1136
      %v1149 = vmax.f32 %v1145, %v1137
      %v1150 = vmax.f32 %v1146, %v1138
      %v1151 = vmax.f32 %v1147, %v1139
      %v1152 = vmax.f32 %v1148, %v1140
      %v1153 = vmax.f32 %v1149, %v1141
      %v1154 = vmax.f32 %v1150, %v1151
      %v1155 = vmax.f32 %v1152, %v1153
      %v1156 = vmax.f32 %v1154, %v1155
      %v1157 = vrot.slane %v1156, 4
      %v1158 = vmax.f32 %v1156, %v1157
      %v1159 = vrot.slane %v1158, 2
      %v1160 = vmax.f32 %v1158, %v1159
      %v1161 = vrot.slane %v1160, 1
      %v1162 = vmax.f32 %v1160, %v1161
      %vm1163 = vcmp.eq.s32.totalorder %v403, 3
      %vm1164 = vcmp.eq.s32.totalorder %v404, 3
      %vm1165 = vcmp.eq.s32.totalorder %v405, 3
      %vm1166 = vcmp.eq.s32.totalorder %v406, 3
      %vm1167 = vcmp.eq.s32.totalorder %v407, 3
      %vm1168 = vcmp.eq.s32.totalorder %v408, 3
      %vm1169 = vcmp.eq.s32.totalorder %v409, 3
      %vm1170 = vcmp.eq.s32.totalorder %v410, 3
      %vm1171 = vcmp.eq.s32.totalorder %v411, 3
      %vm1172 = vcmp.eq.s32.totalorder %v412, 3
      %vm1173 = vcmp.eq.s32.totalorder %v413, 3
      %vm1174 = vcmp.eq.s32.totalorder %v414, 3
      %vm1175 = vcmp.eq.s32.totalorder %v415, 3
      %vm1176 = vcmp.eq.s32.totalorder %v416, 3
      %vm1177 = vcmp.eq.s32.totalorder %v417, 3
      %vm1178 = vcmp.eq.s32.totalorder %v418, 3
      %v1179 = vsel %vm1163, 1, 0
      %v1180 = vsel %vm1164, 1, 0
      %v1181 = vsel %vm1165, 1, 0
      %v1182 = vsel %vm1166, 1, 0
      %v1183 = vsel %vm1167, 1, 0
      %v1184 = vsel %vm1168, 1, 0
      %v1185 = vsel %vm1169, 1, 0
      %v1186 = vsel %vm1170, 1, 0
      %v1187 = vsel %vm1171, 1, 0
      %v1188 = vsel %vm1172, 1, 0
      %v1189 = vsel %vm1173, 1, 0
      %v1190 = vsel %vm1174, 1, 0
      %v1191 = vsel %vm1175, 1, 0
      %v1192 = vsel %vm1176, 1, 0
      %v1193 = vsel %vm1177, 1, 0
      %v1194 = vsel %vm1178, 1, 0
      %1195 = vset.pattern.permute.xlu0 0
      %1196 = vperm.xlu0 %1195, %v1179
      %v1197 = vpop.permute.xlu0 %1196
      %1198 = vset.pattern.permute.xlu0 0
      %1199 = vperm.xlu0 %1198, %v1180
      %v1200 = vpop.permute.xlu0 %1199
      %1201 = vset.pattern.permute.xlu0 0
      %1202 = vperm.xlu0 %1201, %v1181
      %v1203 = vpop.permute.xlu0 %1202
      %1204 = vset.pattern.permute.xlu0 0
      %1205 = vperm.xlu0 %1204, %v1182
      %v1206 = vpop.permute.xlu0 %1205
      %1207 = vset.pattern.permute.xlu0 0
      %1208 = vperm.xlu0 %1207, %v1183
      %v1209 = vpop.permute.xlu0 %1208
      %1210 = vset.pattern.permute.xlu0 0
      %1211 = vperm.xlu0 %1210, %v1184
      %v1212 = vpop.permute.xlu0 %1211
      %1213 = vset.pattern.permute.xlu0 0
      %1214 = vperm.xlu0 %1213, %v1185
      %v1215 = vpop.permute.xlu0 %1214
      %1216 = vset.pattern.permute.xlu0 0
      %1217 = vperm.xlu0 %1216, %v1186
      %v1218 = vpop.permute.xlu0 %1217
      %1219 = vset.pattern.permute.xlu0 0
      %1220 = vperm.xlu0 %1219, %v1187
      %v1221 = vpop.permute.xlu0 %1220
      %1222 = vset.pattern.permute.xlu0 0
      %1223 = vperm.xlu0 %1222, %v1188
      %v1224 = vpop.permute.xlu0 %1223
      %1225 = vset.pattern.permute.xlu0 0
      %1226 = vperm.xlu0 %1225, %v1189
      %v1227 = vpop.permute.xlu0 %1226
      %1228 = vset.pattern.permute.xlu0 0
      %1229 = vperm.xlu0 %1228, %v1190
      %v1230 = vpop.permute.xlu0 %1229
      %1231 = vset.pattern.permute.xlu0 0
      %1232 = vperm.xlu0 %1231, %v1191
      %v1233 = vpop.permute.xlu0 %1232
      %1234 = vset.pattern.permute.xlu0 0
      %1235 = vperm.xlu0 %1234, %v1192
      %v1236 = vpop.permute.xlu0 %1235
      %1237 = vset.pattern.permute.xlu0 0
      %1238 = vperm.xlu0 %1237, %v1193
      %v1239 = vpop.permute.xlu0 %1238
      %1240 = vset.pattern.permute.xlu0 0
      %1241 = vperm.xlu0 %1240, %v1194
      %v1242 = vpop.permute.xlu0 %1241
      %vm1243 = vcmp.eq.s32.totalorder %v1197, 1
      %vm1244 = vcmp.eq.s32.totalorder %v1200, 1
      %vm1245 = vcmp.eq.s32.totalorder %v1203, 1
      %vm1246 = vcmp.eq.s32.totalorder %v1206, 1
      %vm1247 = vcmp.eq.s32.totalorder %v1209, 1
      %vm1248 = vcmp.eq.s32.totalorder %v1212, 1
      %vm1249 = vcmp.eq.s32.totalorder %v1215, 1
      %vm1250 = vcmp.eq.s32.totalorder %v1218, 1
      %vm1251 = vcmp.eq.s32.totalorder %v1221, 1
      %vm1252 = vcmp.eq.s32.totalorder %v1224, 1
      %vm1253 = vcmp.eq.s32.totalorder %v1227, 1
      %vm1254 = vcmp.eq.s32.totalorder %v1230, 1
      %vm1255 = vcmp.eq.s32.totalorder %v1233, 1
      %vm1256 = vcmp.eq.s32.totalorder %v1236, 1
      %vm1257 = vcmp.eq.s32.totalorder %v1239, 1
      %vm1258 = vcmp.eq.s32.totalorder %v1242, 1
      %v1259 = vsel %vm1243, %v386, -inf
      %v1260 = vsel %vm1244, %v387, -inf
      %v1261 = vsel %vm1245, %v388, -inf
      %v1262 = vsel %vm1246, %v389, -inf
      %v1263 = vsel %vm1247, %v390, -inf
      %v1264 = vsel %vm1248, %v391, -inf
      %v1265 = vsel %vm1249, %v392, -inf
      %v1266 = vsel %vm1250, %v393, -inf
      %v1267 = vsel %vm1251, %v394, -inf
      %v1268 = vsel %vm1252, %v395, -inf
      %v1269 = vsel %vm1253, %v396, -inf
      %v1270 = vsel %vm1254, %v397, -inf
      %v1271 = vsel %vm1255, %v398, -inf
      %v1272 = vsel %vm1256, %v399, -inf
      %v1273 = vsel %vm1257, %v400, -inf
      %v1274 = vsel %vm1258, %v401, -inf
      %v1275 = vmax.f32 %v1259, %v1263
      %v1276 = vmax.f32 %v1260, %v1264
      %v1277 = vmax.f32 %v1261, %v1265
      %v1278 = vmax.f32 %v1262, %v1266
      %v1279 = vmax.f32 %v1275, %v1267
      %v1280 = vmax.f32 %v1276, %v1268
      %v1281 = vmax.f32 %v1277, %v1269
      %v1282 = vmax.f32 %v1278, %v1270
      %v1283 = vmax.f32 %v1279, %v1271
      %v1284 = vmax.f32 %v1280, %v1272
      %v1285 = vmax.f32 %v1281, %v1273
      %v1286 = vmax.f32 %v1282, %v1274
      %v1287 = vmax.f32 %v1283, %v1284
      %v1288 = vmax.f32 %v1285, %v1286
      %v1289 = vmax.f32 %v1287, %v1288
      %v1290 = vrot.slane %v1289, 4
      %v1291 = vmax.f32 %v1289, %v1290
      %v1292 = vrot.slane %v1291, 2
      %v1293 = vmax.f32 %v1291, %v1292
      %v1294 = vrot.slane %v1293, 1
      %v1295 = vmax.f32 %v1293, %v1294
      %vm1296 = vcmp.eq.s32.totalorder %v403, 4
      %vm1297 = vcmp.eq.s32.totalorder %v404, 4
      %vm1298 = vcmp.eq.s32.totalorder %v405, 4
      %vm1299 = vcmp.eq.s32.totalorder %v406, 4
      %vm1300 = vcmp.eq.s32.totalorder %v407, 4
      %vm1301 = vcmp.eq.s32.totalorder %v408, 4
      %vm1302 = vcmp.eq.s32.totalorder %v409, 4
      %vm1303 = vcmp.eq.s32.totalorder %v410, 4
      %vm1304 = vcmp.eq.s32.totalorder %v411, 4
      %vm1305 = vcmp.eq.s32.totalorder %v412, 4
      %vm1306 = vcmp.eq.s32.totalorder %v413, 4
      %vm1307 = vcmp.eq.s32.totalorder %v414, 4
      %vm1308 = vcmp.eq.s32.totalorder %v415, 4
      %vm1309 = vcmp.eq.s32.totalorder %v416, 4
      %vm1310 = vcmp.eq.s32.totalorder %v417, 4
      %vm1311 = vcmp.eq.s32.totalorder %v418, 4
      %v1312 = vsel %vm1296, 1, 0
      %v1313 = vsel %vm1297, 1, 0
      %v1314 = vsel %vm1298, 1, 0
      %v1315 = vsel %vm1299, 1, 0
      %v1316 = vsel %vm1300, 1, 0
      %v1317 = vsel %vm1301, 1, 0
      %v1318 = vsel %vm1302, 1, 0
      %v1319 = vsel %vm1303, 1, 0
      %v1320 = vsel %vm1304, 1, 0
      %v1321 = vsel %vm1305, 1, 0
      %v1322 = vsel %vm1306, 1, 0
      %v1323 = vsel %vm1307, 1, 0
      %v1324 = vsel %vm1308, 1, 0
      %v1325 = vsel %vm1309, 1, 0
      %v1326 = vsel %vm1310, 1, 0
      %v1327 = vsel %vm1311, 1, 0
      %1328 = vset.pattern.permute.xlu0 0
      %1329 = vperm.xlu0 %1328, %v1312
      %v1330 = vpop.permute.xlu0 %1329
      %1331 = vset.pattern.permute.xlu0 0
      %1332 = vperm.xlu0 %1331, %v1313
      %v1333 = vpop.permute.xlu0 %1332
      %1334 = vset.pattern.permute.xlu0 0
      %1335 = vperm.xlu0 %1334, %v1314
      %v1336 = vpop.permute.xlu0 %1335
      %1337 = vset.pattern.permute.xlu0 0
      %1338 = vperm.xlu0 %1337, %v1315
      %v1339 = vpop.permute.xlu0 %1338
      %1340 = vset.pattern.permute.xlu0 0
      %1341 = vperm.xlu0 %1340, %v1316
      %v1342 = vpop.permute.xlu0 %1341
      %1343 = vset.pattern.permute.xlu0 0
      %1344 = vperm.xlu0 %1343, %v1317
      %v1345 = vpop.permute.xlu0 %1344
      %1346 = vset.pattern.permute.xlu0 0
      %1347 = vperm.xlu0 %1346, %v1318
      %v1348 = vpop.permute.xlu0 %1347
      %1349 = vset.pattern.permute.xlu0 0
      %1350 = vperm.xlu0 %1349, %v1319
      %v1351 = vpop.permute.xlu0 %1350
      %1352 = vset.pattern.permute.xlu0 0
      %1353 = vperm.xlu0 %1352, %v1320
      %v1354 = vpop.permute.xlu0 %1353
      %1355 = vset.pattern.permute.xlu0 0
      %1356 = vperm.xlu0 %1355, %v1321
      %v1357 = vpop.permute.xlu0 %1356
      %1358 = vset.pattern.permute.xlu0 0
      %1359 = vperm.xlu0 %1358, %v1322
      %v1360 = vpop.permute.xlu0 %1359
      %1361 = vset.pattern.permute.xlu0 0
      %1362 = vperm.xlu0 %1361, %v1323
      %v1363 = vpop.permute.xlu0 %1362
      %1364 = vset.pattern.permute.xlu0 0
      %1365 = vperm.xlu0 %1364, %v1324
      %v1366 = vpop.permute.xlu0 %1365
      %1367 = vset.pattern.permute.xlu0 0
      %1368 = vperm.xlu0 %1367, %v1325
      %v1369 = vpop.permute.xlu0 %1368
      %1370 = vset.pattern.permute.xlu0 0
      %1371 = vperm.xlu0 %1370, %v1326
      %v1372 = vpop.permute.xlu0 %1371
      %1373 = vset.pattern.permute.xlu0 0
      %1374 = vperm.xlu0 %1373, %v1327
      %v1375 = vpop.permute.xlu0 %1374
      %vm1376 = vcmp.eq.s32.totalorder %v1330, 1
      %vm1377 = vcmp.eq.s32.totalorder %v1333, 1
      %vm1378 = vcmp.eq.s32.totalorder %v1336, 1
      %vm1379 = vcmp.eq.s32.totalorder %v1339, 1
      %vm1380 = vcmp.eq.s32.totalorder %v1342, 1
      %vm1381 = vcmp.eq.s32.totalorder %v1345, 1
      %vm1382 = vcmp.eq.s32.totalorder %v1348, 1
      %vm1383 = vcmp.eq.s32.totalorder %v1351, 1
      %vm1384 = vcmp.eq.s32.totalorder %v1354, 1
      %vm1385 = vcmp.eq.s32.totalorder %v1357, 1
      %vm1386 = vcmp.eq.s32.totalorder %v1360, 1
      %vm1387 = vcmp.eq.s32.totalorder %v1363, 1
      %vm1388 = vcmp.eq.s32.totalorder %v1366, 1
      %vm1389 = vcmp.eq.s32.totalorder %v1369, 1
      %vm1390 = vcmp.eq.s32.totalorder %v1372, 1
      %vm1391 = vcmp.eq.s32.totalorder %v1375, 1
      %v1392 = vsel %vm1376, %v386, -inf
      %v1393 = vsel %vm1377, %v387, -inf
      %v1394 = vsel %vm1378, %v388, -inf
      %v1395 = vsel %vm1379, %v389, -inf
      %v1396 = vsel %vm1380, %v390, -inf
      %v1397 = vsel %vm1381, %v391, -inf
      %v1398 = vsel %vm1382, %v392, -inf
      %v1399 = vsel %vm1383, %v393, -inf
      %v1400 = vsel %vm1384, %v394, -inf
      %v1401 = vsel %vm1385, %v395, -inf
      %v1402 = vsel %vm1386, %v396, -inf
      %v1403 = vsel %vm1387, %v397, -inf
      %v1404 = vsel %vm1388, %v398, -inf
      %v1405 = vsel %vm1389, %v399, -inf
      %v1406 = vsel %vm1390, %v400, -inf
      %v1407 = vsel %vm1391, %v401, -inf
      %v1408 = vmax.f32 %v1392, %v1396
      %v1409 = vmax.f32 %v1393, %v1397
      %v1410 = vmax.f32 %v1394, %v1398
      %v1411 = vmax.f32 %v1395, %v1399
      %v1412 = vmax.f32 %v1408, %v1400
      %v1413 = vmax.f32 %v1409, %v1401
      %v1414 = vmax.f32 %v1410, %v1402
      %v1415 = vmax.f32 %v1411, %v1403
      %v1416 = vmax.f32 %v1412, %v1404
      %v1417 = vmax.f32 %v1413, %v1405
      %v1418 = vmax.f32 %v1414, %v1406
      %v1419 = vmax.f32 %v1415, %v1407
      %v1420 = vmax.f32 %v1416, %v1417
      %v1421 = vmax.f32 %v1418, %v1419
      %v1422 = vmax.f32 %v1420, %v1421
      %v1423 = vrot.slane %v1422, 4
      %v1424 = vmax.f32 %v1422, %v1423
      %v1425 = vrot.slane %v1424, 2
      %v1426 = vmax.f32 %v1424, %v1425
      %v1427 = vrot.slane %v1426, 1
      %v1428 = vmax.f32 %v1426, %v1427
      %vm1429 = vcmp.eq.s32.totalorder %v403, 5
      %vm1430 = vcmp.eq.s32.totalorder %v404, 5
      %vm1431 = vcmp.eq.s32.totalorder %v405, 5
      %vm1432 = vcmp.eq.s32.totalorder %v406, 5
      %vm1433 = vcmp.eq.s32.totalorder %v407, 5
      %vm1434 = vcmp.eq.s32.totalorder %v408, 5
      %vm1435 = vcmp.eq.s32.totalorder %v409, 5
      %vm1436 = vcmp.eq.s32.totalorder %v410, 5
      %vm1437 = vcmp.eq.s32.totalorder %v411, 5
      %vm1438 = vcmp.eq.s32.totalorder %v412, 5
      %vm1439 = vcmp.eq.s32.totalorder %v413, 5
      %vm1440 = vcmp.eq.s32.totalorder %v414, 5
      %vm1441 = vcmp.eq.s32.totalorder %v415, 5
      %vm1442 = vcmp.eq.s32.totalorder %v416, 5
      %vm1443 = vcmp.eq.s32.totalorder %v417, 5
      %vm1444 = vcmp.eq.s32.totalorder %v418, 5
      %v1445 = vsel %vm1429, 1, 0
      %v1446 = vsel %vm1430, 1, 0
      %v1447 = vsel %vm1431, 1, 0
      %v1448 = vsel %vm1432, 1, 0
      %v1449 = vsel %vm1433, 1, 0
      %v1450 = vsel %vm1434, 1, 0
      %v1451 = vsel %vm1435, 1, 0
      %v1452 = vsel %vm1436, 1, 0
      %v1453 = vsel %vm1437, 1, 0
      %v1454 = vsel %vm1438, 1, 0
      %v1455 = vsel %vm1439, 1, 0
      %v1456 = vsel %vm1440, 1, 0
      %v1457 = vsel %vm1441, 1, 0
      %v1458 = vsel %vm1442, 1, 0
      %v1459 = vsel %vm1443, 1, 0
      %v1460 = vsel %vm1444, 1, 0
      %1461 = vset.pattern.permute.xlu0 0
      %1462 = vperm.xlu0 %1461, %v1445
      %v1463 = vpop.permute.xlu0 %1462
      %1464 = vset.pattern.permute.xlu0 0
      %1465 = vperm.xlu0 %1464, %v1446
      %v1466 = vpop.permute.xlu0 %1465
      %1467 = vset.pattern.permute.xlu0 0
      %1468 = vperm.xlu0 %1467, %v1447
      %v1469 = vpop.permute.xlu0 %1468
      %1470 = vset.pattern.permute.xlu0 0
      %1471 = vperm.xlu0 %1470, %v1448
      %v1472 = vpop.permute.xlu0 %1471
      %1473 = vset.pattern.permute.xlu0 0
      %1474 = vperm.xlu0 %1473, %v1449
      %v1475 = vpop.permute.xlu0 %1474
      %1476 = vset.pattern.permute.xlu0 0
      %1477 = vperm.xlu0 %1476, %v1450
      %v1478 = vpop.permute.xlu0 %1477
      %1479 = vset.pattern.permute.xlu0 0
      %1480 = vperm.xlu0 %1479, %v1451
      %v1481 = vpop.permute.xlu0 %1480
      %1482 = vset.pattern.permute.xlu0 0
      %1483 = vperm.xlu0 %1482, %v1452
      %v1484 = vpop.permute.xlu0 %1483
      %1485 = vset.pattern.permute.xlu0 0
      %1486 = vperm.xlu0 %1485, %v1453
      %v1487 = vpop.permute.xlu0 %1486
      %1488 = vset.pattern.permute.xlu0 0
      %1489 = vperm.xlu0 %1488, %v1454
      %v1490 = vpop.permute.xlu0 %1489
      %1491 = vset.pattern.permute.xlu0 0
      %1492 = vperm.xlu0 %1491, %v1455
      %v1493 = vpop.permute.xlu0 %1492
      %1494 = vset.pattern.permute.xlu0 0
      %1495 = vperm.xlu0 %1494, %v1456
      %v1496 = vpop.permute.xlu0 %1495
      %1497 = vset.pattern.permute.xlu0 0
      %1498 = vperm.xlu0 %1497, %v1457
      %v1499 = vpop.permute.xlu0 %1498
      %1500 = vset.pattern.permute.xlu0 0
      %1501 = vperm.xlu0 %1500, %v1458
      %v1502 = vpop.permute.xlu0 %1501
      %1503 = vset.pattern.permute.xlu0 0
      %1504 = vperm.xlu0 %1503, %v1459
      %v1505 = vpop.permute.xlu0 %1504
      %1506 = vset.pattern.permute.xlu0 0
      %1507 = vperm.xlu0 %1506, %v1460
      %v1508 = vpop.permute.xlu0 %1507
      %vm1509 = vcmp.eq.s32.totalorder %v1463, 1
      %vm1510 = vcmp.eq.s32.totalorder %v1466, 1
      %vm1511 = vcmp.eq.s32.totalorder %v1469, 1
      %vm1512 = vcmp.eq.s32.totalorder %v1472, 1
      %vm1513 = vcmp.eq.s32.totalorder %v1475, 1
      %vm1514 = vcmp.eq.s32.totalorder %v1478, 1
      %vm1515 = vcmp.eq.s32.totalorder %v1481, 1
      %vm1516 = vcmp.eq.s32.totalorder %v1484, 1
      %vm1517 = vcmp.eq.s32.totalorder %v1487, 1
      %vm1518 = vcmp.eq.s32.totalorder %v1490, 1
      %vm1519 = vcmp.eq.s32.totalorder %v1493, 1
      %vm1520 = vcmp.eq.s32.totalorder %v1496, 1
      %vm1521 = vcmp.eq.s32.totalorder %v1499, 1
      %vm1522 = vcmp.eq.s32.totalorder %v1502, 1
      %vm1523 = vcmp.eq.s32.totalorder %v1505, 1
      %vm1524 = vcmp.eq.s32.totalorder %v1508, 1
      %v1525 = vsel %vm1509, %v386, -inf
      %v1526 = vsel %vm1510, %v387, -inf
      %v1527 = vsel %vm1511, %v388, -inf
      %v1528 = vsel %vm1512, %v389, -inf
      %v1529 = vsel %vm1513, %v390, -inf
      %v1530 = vsel %vm1514, %v391, -inf
      %v1531 = vsel %vm1515, %v392, -inf
      %v1532 = vsel %vm1516, %v393, -inf
      %v1533 = vsel %vm1517, %v394, -inf
      %v1534 = vsel %vm1518, %v395, -inf
      %v1535 = vsel %vm1519, %v396, -inf
      %v1536 = vsel %vm1520, %v397, -inf
      %v1537 = vsel %vm1521, %v398, -inf
      %v1538 = vsel %vm1522, %v399, -inf
      %v1539 = vsel %vm1523, %v400, -inf
      %v1540 = vsel %vm1524, %v401, -inf
      %v1541 = vmax.f32 %v1525, %v1529
      %v1542 = vmax.f32 %v1526, %v1530
      %v1543 = vmax.f32 %v1527, %v1531
      %v1544 = vmax.f32 %v1528, %v1532
      %v1545 = vmax.f32 %v1541, %v1533
      %v1546 = vmax.f32 %v1542, %v1534
      %v1547 = vmax.f32 %v1543, %v1535
      %v1548 = vmax.f32 %v1544, %v1536
      %v1549 = vmax.f32 %v1545, %v1537
      %v1550 = vmax.f32 %v1546, %v1538
      %v1551 = vmax.f32 %v1547, %v1539
      %v1552 = vmax.f32 %v1548, %v1540
      %v1553 = vmax.f32 %v1549, %v1550
      %v1554 = vmax.f32 %v1551, %v1552
      %v1555 = vmax.f32 %v1553, %v1554
      %v1556 = vrot.slane %v1555, 4
      %v1557 = vmax.f32 %v1555, %v1556
      %v1558 = vrot.slane %v1557, 2
      %v1559 = vmax.f32 %v1557, %v1558
      %v1560 = vrot.slane %v1559, 1
      %v1561 = vmax.f32 %v1559, %v1560
      %vm1562 = vcmp.eq.s32.totalorder %v403, 6
      %vm1563 = vcmp.eq.s32.totalorder %v404, 6
      %vm1564 = vcmp.eq.s32.totalorder %v405, 6
      %vm1565 = vcmp.eq.s32.totalorder %v406, 6
      %vm1566 = vcmp.eq.s32.totalorder %v407, 6
      %vm1567 = vcmp.eq.s32.totalorder %v408, 6
      %vm1568 = vcmp.eq.s32.totalorder %v409, 6
      %vm1569 = vcmp.eq.s32.totalorder %v410, 6
      %vm1570 = vcmp.eq.s32.totalorder %v411, 6
      %vm1571 = vcmp.eq.s32.totalorder %v412, 6
      %vm1572 = vcmp.eq.s32.totalorder %v413, 6
      %vm1573 = vcmp.eq.s32.totalorder %v414, 6
      %vm1574 = vcmp.eq.s32.totalorder %v415, 6
      %vm1575 = vcmp.eq.s32.totalorder %v416, 6
      %vm1576 = vcmp.eq.s32.totalorder %v417, 6
      %vm1577 = vcmp.eq.s32.totalorder %v418, 6
      %v1578 = vsel %vm1562, 1, 0
      %v1579 = vsel %vm1563, 1, 0
      %v1580 = vsel %vm1564, 1, 0
      %v1581 = vsel %vm1565, 1, 0
      %v1582 = vsel %vm1566, 1, 0
      %v1583 = vsel %vm1567, 1, 0
      %v1584 = vsel %vm1568, 1, 0
      %v1585 = vsel %vm1569, 1, 0
      %v1586 = vsel %vm1570, 1, 0
      %v1587 = vsel %vm1571, 1, 0
      %v1588 = vsel %vm1572, 1, 0
      %v1589 = vsel %vm1573, 1, 0
      %v1590 = vsel %vm1574, 1, 0
      %v1591 = vsel %vm1575, 1, 0
      %v1592 = vsel %vm1576, 1, 0
      %v1593 = vsel %vm1577, 1, 0
      %1594 = vset.pattern.permute.xlu0 0
      %1595 = vperm.xlu0 %1594, %v1578
      %v1596 = vpop.permute.xlu0 %1595
      %1597 = vset.pattern.permute.xlu0 0
      %1598 = vperm.xlu0 %1597, %v1579
      %v1599 = vpop.permute.xlu0 %1598
      %1600 = vset.pattern.permute.xlu0 0
      %1601 = vperm.xlu0 %1600, %v1580
      %v1602 = vpop.permute.xlu0 %1601
      %1603 = vset.pattern.permute.xlu0 0
      %1604 = vperm.xlu0 %1603, %v1581
      %v1605 = vpop.permute.xlu0 %1604
      %1606 = vset.pattern.permute.xlu0 0
      %1607 = vperm.xlu0 %1606, %v1582
      %v1608 = vpop.permute.xlu0 %1607
      %1609 = vset.pattern.permute.xlu0 0
      %1610 = vperm.xlu0 %1609, %v1583
      %v1611 = vpop.permute.xlu0 %1610
      %1612 = vset.pattern.permute.xlu0 0
      %1613 = vperm.xlu0 %1612, %v1584
      %v1614 = vpop.permute.xlu0 %1613
      %1615 = vset.pattern.permute.xlu0 0
      %1616 = vperm.xlu0 %1615, %v1585
      %v1617 = vpop.permute.xlu0 %1616
      %1618 = vset.pattern.permute.xlu0 0
      %1619 = vperm.xlu0 %1618, %v1586
      %v1620 = vpop.permute.xlu0 %1619
      %1621 = vset.pattern.permute.xlu0 0
      %1622 = vperm.xlu0 %1621, %v1587
      %v1623 = vpop.permute.xlu0 %1622
      %1624 = vset.pattern.permute.xlu0 0
      %1625 = vperm.xlu0 %1624, %v1588
      %v1626 = vpop.permute.xlu0 %1625
      %1627 = vset.pattern.permute.xlu0 0
      %1628 = vperm.xlu0 %1627, %v1589
      %v1629 = vpop.permute.xlu0 %1628
      %1630 = vset.pattern.permute.xlu0 0
      %1631 = vperm.xlu0 %1630, %v1590
      %v1632 = vpop.permute.xlu0 %1631
      %1633 = vset.pattern.permute.xlu0 0
      %1634 = vperm.xlu0 %1633, %v1591
      %v1635 = vpop.permute.xlu0 %1634
      %1636 = vset.pattern.permute.xlu0 0
      %1637 = vperm.xlu0 %1636, %v1592
      %v1638 = vpop.permute.xlu0 %1637
      %1639 = vset.pattern.permute.xlu0 0
      %1640 = vperm.xlu0 %1639, %v1593
      %v1641 = vpop.permute.xlu0 %1640
      %vm1642 = vcmp.eq.s32.totalorder %v1596, 1
      %vm1643 = vcmp.eq.s32.totalorder %v1599, 1
      %vm1644 = vcmp.eq.s32.totalorder %v1602, 1
      %vm1645 = vcmp.eq.s32.totalorder %v1605, 1
      %vm1646 = vcmp.eq.s32.totalorder %v1608, 1
      %vm1647 = vcmp.eq.s32.totalorder %v1611, 1
      %vm1648 = vcmp.eq.s32.totalorder %v1614, 1
      %vm1649 = vcmp.eq.s32.totalorder %v1617, 1
      %vm1650 = vcmp.eq.s32.totalorder %v1620, 1
      %vm1651 = vcmp.eq.s32.totalorder %v1623, 1
      %vm1652 = vcmp.eq.s32.totalorder %v1626, 1
      %vm1653 = vcmp.eq.s32.totalorder %v1629, 1
      %vm1654 = vcmp.eq.s32.totalorder %v1632, 1
      %vm1655 = vcmp.eq.s32.totalorder %v1635, 1
      %vm1656 = vcmp.eq.s32.totalorder %v1638, 1
      %vm1657 = vcmp.eq.s32.totalorder %v1641, 1
      %v1658 = vsel %vm1642, %v386, -inf
      %v1659 = vsel %vm1643, %v387, -inf
      %v1660 = vsel %vm1644, %v388, -inf
      %v1661 = vsel %vm1645, %v389, -inf
      %v1662 = vsel %vm1646, %v390, -inf
      %v1663 = vsel %vm1647, %v391, -inf
      %v1664 = vsel %vm1648, %v392, -inf
      %v1665 = vsel %vm1649, %v393, -inf
      %v1666 = vsel %vm1650, %v394, -inf
      %v1667 = vsel %vm1651, %v395, -inf
      %v1668 = vsel %vm1652, %v396, -inf
      %v1669 = vsel %vm1653, %v397, -inf
      %v1670 = vsel %vm1654, %v398, -inf
      %v1671 = vsel %vm1655, %v399, -inf
      %v1672 = vsel %vm1656, %v400, -inf
      %v1673 = vsel %vm1657, %v401, -inf
      %v1674 = vmax.f32 %v1658, %v1662
      %v1675 = vmax.f32 %v1659, %v1663
      %v1676 = vmax.f32 %v1660, %v1664
      %v1677 = vmax.f32 %v1661, %v1665
      %v1678 = vmax.f32 %v1674, %v1666
      %v1679 = vmax.f32 %v1675, %v1667
      %v1680 = vmax.f32 %v1676, %v1668
      %v1681 = vmax.f32 %v1677, %v1669
      %v1682 = vmax.f32 %v1678, %v1670
      %v1683 = vmax.f32 %v1679, %v1671
      %v1684 = vmax.f32 %v1680, %v1672
      %v1685 = vmax.f32 %v1681, %v1673
      %v1686 = vmax.f32 %v1682, %v1683
      %v1687 = vmax.f32 %v1684, %v1685
      %v1688 = vmax.f32 %v1686, %v1687
      %v1689 = vrot.slane %v1688, 4
      %v1690 = vmax.f32 %v1688, %v1689
      %v1691 = vrot.slane %v1690, 2
      %v1692 = vmax.f32 %v1690, %v1691
      %v1693 = vrot.slane %v1692, 1
      %v1694 = vmax.f32 %v1692, %v1693
      %vm1695 = vcmp.eq.s32.totalorder %v403, 7
      %vm1696 = vcmp.eq.s32.totalorder %v404, 7
      %vm1697 = vcmp.eq.s32.totalorder %v405, 7
      %vm1698 = vcmp.eq.s32.totalorder %v406, 7
      %vm1699 = vcmp.eq.s32.totalorder %v407, 7
      %vm1700 = vcmp.eq.s32.totalorder %v408, 7
      %vm1701 = vcmp.eq.s32.totalorder %v409, 7
      %vm1702 = vcmp.eq.s32.totalorder %v410, 7
      %vm1703 = vcmp.eq.s32.totalorder %v411, 7
      %vm1704 = vcmp.eq.s32.totalorder %v412, 7
      %vm1705 = vcmp.eq.s32.totalorder %v413, 7
      %vm1706 = vcmp.eq.s32.totalorder %v414, 7
      %vm1707 = vcmp.eq.s32.totalorder %v415, 7
      %vm1708 = vcmp.eq.s32.totalorder %v416, 7
      %vm1709 = vcmp.eq.s32.totalorder %v417, 7
      %vm1710 = vcmp.eq.s32.totalorder %v418, 7
      %v1711 = vsel %vm1695, 1, 0
      %v1712 = vsel %vm1696, 1, 0
      %v1713 = vsel %vm1697, 1, 0
      %v1714 = vsel %vm1698, 1, 0
      %v1715 = vsel %vm1699, 1, 0
      %v1716 = vsel %vm1700, 1, 0
      %v1717 = vsel %vm1701, 1, 0
      %v1718 = vsel %vm1702, 1, 0
      %v1719 = vsel %vm1703, 1, 0
      %v1720 = vsel %vm1704, 1, 0
      %v1721 = vsel %vm1705, 1, 0
      %v1722 = vsel %vm1706, 1, 0
      %v1723 = vsel %vm1707, 1, 0
      %v1724 = vsel %vm1708, 1, 0
      %v1725 = vsel %vm1709, 1, 0
      %v1726 = vsel %vm1710, 1, 0
      %1727 = vset.pattern.permute.xlu0 0
      %1728 = vperm.xlu0 %1727, %v1711
      %v1729 = vpop.permute.xlu0 %1728
      %1730 = vset.pattern.permute.xlu0 0
      %1731 = vperm.xlu0 %1730, %v1712
      %v1732 = vpop.permute.xlu0 %1731
      %1733 = vset.pattern.permute.xlu0 0
      %1734 = vperm.xlu0 %1733, %v1713
      %v1735 = vpop.permute.xlu0 %1734
      %1736 = vset.pattern.permute.xlu0 0
      %1737 = vperm.xlu0 %1736, %v1714
      %v1738 = vpop.permute.xlu0 %1737
      %1739 = vset.pattern.permute.xlu0 0
      %1740 = vperm.xlu0 %1739, %v1715
      %v1741 = vpop.permute.xlu0 %1740
      %1742 = vset.pattern.permute.xlu0 0
      %1743 = vperm.xlu0 %1742, %v1716
      %v1744 = vpop.permute.xlu0 %1743
      %1745 = vset.pattern.permute.xlu0 0
      %1746 = vperm.xlu0 %1745, %v1717
      %v1747 = vpop.permute.xlu0 %1746
      %1748 = vset.pattern.permute.xlu0 0
      %1749 = vperm.xlu0 %1748, %v1718
      %v1750 = vpop.permute.xlu0 %1749
      %1751 = vset.pattern.permute.xlu0 0
      %1752 = vperm.xlu0 %1751, %v1719
      %v1753 = vpop.permute.xlu0 %1752
      %1754 = vset.pattern.permute.xlu0 0
      %1755 = vperm.xlu0 %1754, %v1720
      %v1756 = vpop.permute.xlu0 %1755
      %1757 = vset.pattern.permute.xlu0 0
      %1758 = vperm.xlu0 %1757, %v1721
      %v1759 = vpop.permute.xlu0 %1758
      %1760 = vset.pattern.permute.xlu0 0
      %1761 = vperm.xlu0 %1760, %v1722
      %v1762 = vpop.permute.xlu0 %1761
      %1763 = vset.pattern.permute.xlu0 0
      %1764 = vperm.xlu0 %1763, %v1723
      %v1765 = vpop.permute.xlu0 %1764
      %1766 = vset.pattern.permute.xlu0 0
      %1767 = vperm.xlu0 %1766, %v1724
      %v1768 = vpop.permute.xlu0 %1767
      %1769 = vset.pattern.permute.xlu0 0
      %1770 = vperm.xlu0 %1769, %v1725
      %v1771 = vpop.permute.xlu0 %1770
      %1772 = vset.pattern.permute.xlu0 0
      %1773 = vperm.xlu0 %1772, %v1726
      %v1774 = vpop.permute.xlu0 %1773
      %vm1775 = vcmp.eq.s32.totalorder %v1729, 1
      %vm1776 = vcmp.eq.s32.totalorder %v1732, 1
      %vm1777 = vcmp.eq.s32.totalorder %v1735, 1
      %vm1778 = vcmp.eq.s32.totalorder %v1738, 1
      %vm1779 = vcmp.eq.s32.totalorder %v1741, 1
      %vm1780 = vcmp.eq.s32.totalorder %v1744, 1
      %vm1781 = vcmp.eq.s32.totalorder %v1747, 1
      %vm1782 = vcmp.eq.s32.totalorder %v1750, 1
      %vm1783 = vcmp.eq.s32.totalorder %v1753, 1
      %vm1784 = vcmp.eq.s32.totalorder %v1756, 1
      %vm1785 = vcmp.eq.s32.totalorder %v1759, 1
      %vm1786 = vcmp.eq.s32.totalorder %v1762, 1
      %vm1787 = vcmp.eq.s32.totalorder %v1765, 1
      %vm1788 = vcmp.eq.s32.totalorder %v1768, 1
      %vm1789 = vcmp.eq.s32.totalorder %v1771, 1
      %vm1790 = vcmp.eq.s32.totalorder %v1774, 1
      %v1791 = vsel %vm1775, %v386, -inf
      %v1792 = vsel %vm1776, %v387, -inf
      %v1793 = vsel %vm1777, %v388, -inf
      %v1794 = vsel %vm1778, %v389, -inf
      %v1795 = vsel %vm1779, %v390, -inf
      %v1796 = vsel %vm1780, %v391, -inf
      %v1797 = vsel %vm1781, %v392, -inf
      %v1798 = vsel %vm1782, %v393, -inf
      %v1799 = vsel %vm1783, %v394, -inf
      %v1800 = vsel %vm1784, %v395, -inf
      %v1801 = vsel %vm1785, %v396, -inf
      %v1802 = vsel %vm1786, %v397, -inf
      %v1803 = vsel %vm1787, %v398, -inf
      %v1804 = vsel %vm1788, %v399, -inf
      %v1805 = vsel %vm1789, %v400, -inf
      %v1806 = vsel %vm1790, %v401, -inf
      %v1807 = vmax.f32 %v1791, %v1795
      %v1808 = vmax.f32 %v1792, %v1796
      %v1809 = vmax.f32 %v1793, %v1797
      %v1810 = vmax.f32 %v1794, %v1798
      %v1811 = vmax.f32 %v1807, %v1799
      %v1812 = vmax.f32 %v1808, %v1800
      %v1813 = vmax.f32 %v1809, %v1801
      %v1814 = vmax.f32 %v1810, %v1802
      %v1815 = vmax.f32 %v1811, %v1803
      %v1816 = vmax.f32 %v1812, %v1804
      %v1817 = vmax.f32 %v1813, %v1805
      %v1818 = vmax.f32 %v1814, %v1806
      %v1819 = vmax.f32 %v1815, %v1816
      %v1820 = vmax.f32 %v1817, %v1818
      %v1821 = vmax.f32 %v1819, %v1820
      %v1822 = vrot.slane %v1821, 4
      %v1823 = vmax.f32 %v1821, %v1822
      %v1824 = vrot.slane %v1823, 2
      %v1825 = vmax.f32 %v1823, %v1824
      %v1826 = vrot.slane %v1825, 1
      %v1827 = vmax.f32 %v1825, %v1826
      %vm1828 = vcmask 1040384
      %v1829 = vsel %vm1828, %v896, %v1029
      %vm1830 = vcmask 1041408
      %v1831 = vsel %vm1830, %v1829, %v1162
      %vm1832 = vcmask 1042432
      %v1833 = vsel %vm1832, %v1831, %v1295
      %vm1834 = vcmask 1043456
      %v1835 = vsel %vm1834, %v1833, %v1428
      %vm1836 = vcmask 1044480
      %v1837 = vsel %vm1836, %v1835, %v1561
      %vm1838 = vcmask 1045504
      %v1839 = vsel %vm1838, %v1837, %v1694
      %vm1840 = vcmask 1046528
      %v1841 = vsel %vm1840, %v1839, %v1827
      %v1842 = vld [vmem:[%s9] sm:$0xff]
      %v1843 = vmax.f32 %v1842, %v1841
      %1844 = vst [vmem:[%s9] sm:$0xff] %v1843
      %p1845 = scmp.eq.s32.totalorder %s22, 1
      // Predicated region
      $region53: #{combined_readout.1} parent=47 // pred_check
        %p1846 = pneg %p1845
      $region54: #{combined_readout.1} parent=47 // pred_check_branch
        %1848 = sbr.rel (%p1846) target = $region56
      $region55: #{combined_readout.1} parent=47 // pred_region
        %v1849 = vld [vmem:[#allocation3] sm:$0xff]
        %v1850 = vld [vmem:[%s7] sm:$0xff]
        %v1851 = vmax.f32 %v1849, 1.0
        %1853 = vset.pattern.permute.xlu0 0
        %1854 = vperm.xlu0 %1853, %v1851
        %v1855 = vpop.permute.xlu0 %1854
        %v1857 = vrcp.pop %v1855
        %v1858 = vmul.f32 %v1850, %v1857
        %1859 = vst [vmem:[%s8] sm:$0xff] %v1858
        %v1860 = vld [vmem:[#allocation2] sm:$0xff]
        %v1861 = vld [vmem:[%s5] sm:$0xff]
        %v1862 = vld [vmem:[%s5 + $0x8] sm:$0xff]
        %v1863 = vld [vmem:[%s5 + $0x10] sm:$0xff]
        %v1864 = vld [vmem:[%s5 + $0x18] sm:$0xff]
        %v1865 = vld [vmem:[%s5 + $0x20] sm:$0xff]
        %v1866 = vld [vmem:[%s5 + $0x28] sm:$0xff]
        %v1867 = vld [vmem:[%s5 + $0x30] sm:$0xff]
        %v1868 = vld [vmem:[%s5 + $0x38] sm:$0xff]
        %v1869 = vld [vmem:[%s5 + $0x40] sm:$0xff]
        %v1870 = vld [vmem:[%s5 + $0x48] sm:$0xff]
        %v1871 = vld [vmem:[%s5 + $0x50] sm:$0xff]
        %v1872 = vld [vmem:[%s5 + $0x58] sm:$0xff]
        %v1873 = vld [vmem:[%s5 + $0x60] sm:$0xff]
        %v1874 = vld [vmem:[%s5 + $0x68] sm:$0xff]
        %v1875 = vld [vmem:[%s5 + $0x70] sm:$0xff]
        %v1876 = vld [vmem:[%s5 + $0x78] sm:$0xff]
        %v1877 = vld [vmem:[%s6] sm:$0x1]
        %1879 = vset.pattern.permute.xlu0 0
        %1880 = vperm.xlu0 %1879, %v1849
        %v1881 = vpop.permute.xlu0 %1880
        %v1884 = vlaneseq
        %v1885 = vshrl.u32 %v1884, 7
        %v1886 = vsub.s32 0, %v1885
        %v1887 = vrot.slane %v1877, %v1886
        %v1889 = vmul.f32 %v1881, %v1887
        %1890 = vmatprep.subr.mxu0 0.0
        %1891 = vmatpush1.msra.mxu0 %v1861
        %1892 = vmatprep.subr.mxu0 0.0
        %1893 = vmatpush1.msra.mxu0 %v1862
        %1894 = vmatprep.subr.mxu0 0.0
        %1895 = vmatpush1.msra.mxu0 %v1863
        %1896 = vmatprep.subr.mxu0 0.0
        %1897 = vmatpush1.msra.mxu0 %v1864
        %1898 = vmatprep.subr.mxu0 0.0
        %1899 = vmatpush1.msra.mxu0 %v1865
        %1900 = vmatprep.subr.mxu0 0.0
        %1901 = vmatpush1.msra.mxu0 %v1866
        %1902 = vmatprep.subr.mxu0 0.0
        %1903 = vmatpush1.msra.mxu0 %v1867
        %1904 = vmatprep.subr.mxu0 0.0
        %1905 = vmatpush1.msra.mxu0 %v1868
        %1906 = vmatprep.subr.mxu0 0.0
        %1907 = vmatpush1.msra.mxu0 %v1869
        %1908 = vmatprep.subr.mxu0 0.0
        %1909 = vmatpush1.msra.mxu0 %v1870
        %1910 = vmatprep.subr.mxu0 0.0
        %1911 = vmatpush1.msra.mxu0 %v1871
        %1912 = vmatprep.subr.mxu0 0.0
        %1913 = vmatpush1.msra.mxu0 %v1872
        %1914 = vmatprep.subr.mxu0 0.0
        %1915 = vmatpush1.msra.mxu0 %v1873
        %1916 = vmatprep.subr.mxu0 0.0
        %1917 = vmatpush1.msra.mxu0 %v1874
        %1918 = vmatprep.subr.mxu0 0.0
        %1919 = vmatpush1.msra.mxu0 %v1875
        %1920 = vmatprep.subr.mxu0 0.0
        %1921 = vmatpush1.msra.mxu0 %v1876
        %1922 = vmatprep.subr.mxu0 0.0
        %1923 = vmatpush1.msra.mxu0 0.0
        %1924 = vmatprep.subr.mxu0 0.0
        %1925 = vmatpush1.msra.mxu0 0.0
        %1926 = vmatprep.subr.mxu0 0.0
        %1927 = vmatpush1.msra.mxu0 0.0
        %1928 = vmatprep.subr.mxu0 0.0
        %1929 = vmatpush1.msra.mxu0 0.0
        %1930 = vmatprep.subr.mxu0 0.0
        %1931 = vmatpush1.msra.mxu0 0.0
        %1932 = vmatprep.subr.mxu0 0.0
        %1933 = vmatpush1.msra.mxu0 0.0
        %1934 = vmatprep.subr.mxu0 0.0
        %1935 = vmatpush1.msra.mxu0 0.0
        %1936 = vmatprep.subr.mxu0 0.0
        %1937 = vmatpush1.msra.mxu0 0.0
        %1938 = vmatprep.subr.mxu0 0.0
        %1939 = vmatpush1.msra.mxu0 0.0
        %1940 = vmatprep.subr.mxu0 0.0
        %1941 = vmatpush1.msra.mxu0 0.0
        %1942 = vmatprep.subr.mxu0 0.0
        %1943 = vmatpush1.msra.mxu0 0.0
        %1944 = vmatprep.subr.mxu0 0.0
        %1945 = vmatpush1.msra.mxu0 0.0
        %1946 = vmatprep.subr.mxu0 0.0
        %1947 = vmatpush1.msra.mxu0 0.0
        %1948 = vmatprep.subr.mxu0 0.0
        %1949 = vmatpush1.msra.mxu0 0.0
        %1950 = vmatprep.subr.mxu0 0.0
        %1951 = vmatpush1.msra.mxu0 0.0
        %1952 = vmatprep.subr.mxu0 0.0
        %1953 = vmatpush1.msra.mxu0 0.0
        %1954 = vmatprep.mubr.f32.mxu0 0.0
        %1955 = vmatmul.mubr.f32.gmra.mrb[0].mxu0 %v1860
        %v1956 = vpop.f32.mrb[0].mxu0
        %v1957 = vadd.f32 %v1889, %v1956
        %v1958 = vpop.f32.mrb[0].mxu0
        %1959 = vdwg.mxu0
        %1960 = vst [vmem:[%s10] sm:$0xff] %v1957
      $region56: #{combined_readout.1} parent=47 // pred_fallthru
        _
      // Predicated region
      $region57: #{combined_readout.1} parent=47 // pred_check
        %p1961 = pneg %p197
      $region58: #{combined_readout.1} parent=47 // pred_check_branch
        %1963 = sbr.rel (%p1961) target = $region60
      $region59: #{combined_readout.1} parent=47 // pred_region
        _
      $region60: #{combined_readout.1} parent=47 // pred_fallthru
        _
      // Predicated region
      $region61: #{combined_readout.1} parent=47 // pred_check
        %p1964 = pneg %p218
      $region62: #{combined_readout.1} parent=47 // pred_check_branch
        %1966 = sbr.rel (%p1964) target = $region64
      $region63: #{combined_readout.1} parent=47 // pred_region
        _
      $region64: #{combined_readout.1} parent=47 // pred_fallthru
        _
      // Predicated region
      $region65: #{combined_readout.1} parent=47 // pred_check
        %p1967 = pneg %p239
      $region66: #{combined_readout.1} parent=47 // pred_check_branch
        %1969 = sbr.rel (%p1967) target = $region68
      $region67: #{combined_readout.1} parent=47 // pred_region
        _
      $region68: #{combined_readout.1} parent=47 // pred_fallthru
        _
      // Predicated region
      $region69: #{combined_readout.1} parent=47 // pred_check
        %p1970 = pneg %p260
      $region70: #{combined_readout.1} parent=47 // pred_check_branch
        %1972 = sbr.rel (%p1970) target = $region72
      $region71: #{combined_readout.1} parent=47 // pred_region
        _
      $region72: #{combined_readout.1} parent=47 // pred_fallthru
        _
      // Predicated region
      $region73: #{combined_readout.1} parent=47 // pred_check
        %p1973 = pneg %p197
      $region74: #{combined_readout.1} parent=47 // pred_check_branch
        %1975 = sbr.rel (%p1973) target = $region76
      $region75: #{combined_readout.1} parent=47 // pred_region
        _
      $region76: #{combined_readout.1} parent=47 // pred_fallthru
        _
      // Predicated region
      $region77: #{combined_readout.1} parent=47 // pred_check
        %p1976 = pneg %p218
      $region78: #{combined_readout.1} parent=47 // pred_check_branch
        %1978 = sbr.rel (%p1976) target = $region80
      $region79: #{combined_readout.1} parent=47 // pred_region
        _
      $region80: #{combined_readout.1} parent=47 // pred_fallthru
        _
      // Predicated region
      $region81: #{combined_readout.1} parent=47 // pred_check
        %p1979 = pneg %p239
      $region82: #{combined_readout.1} parent=47 // pred_check_branch
        %1981 = sbr.rel (%p1979) target = $region84
      $region83: #{combined_readout.1} parent=47 // pred_region
        _
      $region84: #{combined_readout.1} parent=47 // pred_fallthru
        _
      // Predicated region
      $region85: #{combined_readout.1} parent=47 // pred_check
        %p1982 = pneg %p260
      $region86: #{combined_readout.1} parent=47 // pred_check_branch
        %1984 = sbr.rel (%p1982) target = $region88
      $region87: #{combined_readout.1} parent=47 // pred_region
        _
      $region88: #{combined_readout.1} parent=47 // pred_fallthru
        _
    $region48: #{combined_readout.1} parent=5 // pred_fallthru
      _
    %p1985 = scmp.le.s32.totalorder 2, %s17
    // Predicated region
    $region89: #{combined_readout.1} parent=5 // pred_check
      %p1986 = pneg %p1985
    $region90: #{combined_readout.1} parent=5 // pred_check_branch
      %1988 = sbr.rel (%p1986) target = $region92
    $region91: #{combined_readout.1} parent=5 // pred_region
      %s1989 = ssub.s32 %s17, 2
    $region92: #{combined_readout.1} parent=5 // pred_fallthru
      _
  $region6: #{combined_readout.1} parent=0 // loop_footer
    %s21 = sadd.s32 1, %s17
  $region7: #{combined_readout.1} parent=0 // loop_footer_branch
    %16 = sbr.rel target = $region3
  $region8: #{combined_readout.1} parent=0 // loop_exit
    _

</llo_original>
